<compile_context>
chip_gen: v7x
topology: tpu7x:2x2x1
jax: 0.10.0
libtpu: 0.0.40
codegen_flags: <defaults>
</compile_context>

<pallas_src>
import functools

import jax
import jax.numpy as jnp
import numpy as np
from jax.experimental import pallas as pl
from jax.experimental.pallas import tpu as pltpu

KSIZE = 7
PAD = 3  # padding for kernel_size=7
_DEFAULT_BLOCK_BYTES = 4 << 20  # ~4 MiB of input per grid step


# ----------------------------------------------------------------------------
# In-kernel helpers
# ----------------------------------------------------------------------------
def _chunked_sum_max(x_ref, c_chunk):
    """Single pass over the channel axis of x_ref -> (sum, max), f32, (bt, HW)."""
    bt, C, HW = x_ref.shape
    n = C // c_chunk
    if n == 1:
        x = x_ref[...].astype(jnp.float32)
        return jnp.sum(x, axis=1), jnp.max(x, axis=1)

    def body(i, carry):
        s, m = carry
        c0 = pl.multiple_of(i * c_chunk, c_chunk)
        xc = x_ref[:, pl.ds(c0, c_chunk), :].astype(jnp.float32)
        return s + jnp.sum(xc, axis=1), jnp.maximum(m, jnp.max(xc, axis=1))

    init = (jnp.zeros((bt, HW), jnp.float32),
            jnp.full((bt, HW), -jnp.inf, jnp.float32))
    return jax.lax.fori_loop(0, n, body, init)


def _chunked_gate(x_ref, o_ref, attn, c_chunk):
    """o[:, c, :] = x[:, c, :] * attn  (attn: (bt, HW) f32), chunked over C."""
    bt, C, HW = x_ref.shape
    n = C // c_chunk
    a = attn[:, None, :]
    if n == 1:
        o_ref[...] = (x_ref[...].astype(jnp.float32) * a).astype(o_ref.dtype)
        return

    @pl.loop(0, n)
    def _(i):
        c0 = pl.multiple_of(i * c_chunk, c_chunk)
        o_ref[:, pl.ds(c0, c_chunk), :] = (
            x_ref[:, pl.ds(c0, c_chunk), :].astype(jnp.float32) * a
        ).astype(o_ref.dtype)


def _conv7x7_sigmoid(w_ref, avg, mmax, H, W):
    """sigmoid(conv7x7([avg, max], padding=3)) on flattened (bt, H*W) tiles."""
    bt, HW = avg.shape

    pos = jax.lax.broadcasted_iota(jnp.int32, (bt, HW), 1)
    if W & (W - 1) == 0:                       # power-of-two fast path
        col = jnp.bitwise_and(pos, W - 1)
    else:
        col = jax.lax.rem(pos, W)

    # Hoisted border masks: 7 row + 7 col masks, each computed exactly once
    # (pre-broadcast to (bt, HW) via the iota shape, so no in-loop broadcasts).
    row_valid, col_valid = {}, {}
    for d in range(-PAD, PAD + 1):
        if d > 0:
            row_valid[d] = pos < (H - d) * W
            col_valid[d] = col < (W - d)
        elif d < 0:
            row_valid[d] = pos >= (-d) * W
            col_valid[d] = col >= (-d)
        else:
            row_valid[d] = None
            col_valid[d] = None

    acc = jnp.zeros((bt, HW), jnp.float32)
    for ky in range(KSIZE):
        dy = ky - PAD
        for kx in range(KSIZE):
            dx = kx - PAD
            w_avg = w_ref[ky * KSIZE + kx]
            w_max = w_ref[KSIZE * KSIZE + ky * KSIZE + kx]
            # Pre-combine the two input channels for this tap (roll is a
            # permutation, so scaling before the roll is equivalent).
            combined = avg * w_avg + mmax * w_max

            s = dy * W + dx                    # shift in flat index space
            if s % HW != 0:
                shifted = pltpu.roll(combined, (-s) % HW, axis=1)
            else:
                shifted = combined

            rv, cv = row_valid[dy], col_valid[dx]
            if rv is not None and cv is not None:
                shifted = jnp.where(jnp.logical_and(rv, cv), shifted, 0.0)
            elif rv is not None:
                shifted = jnp.where(rv, shifted, 0.0)
            elif cv is not None:
                shifted = jnp.where(cv, shifted, 0.0)

            acc = acc + shifted

    return jax.nn.sigmoid(acc)


# ----------------------------------------------------------------------------
# Kernels
# ----------------------------------------------------------------------------
def _sa_fused_kernel(w_ref, x_ref, o_ref, *, H, W, c_chunk):
    """Single-pass: reduce over C -> 7x7 conv -> sigmoid -> gate, one block."""
    C = x_ref.shape[1]
    ssum, smax = _chunked_sum_max(x_ref, c_chunk)
    avg = ssum * (1.0 / C)
    attn = _conv7x7_sigmoid(w_ref, avg, smax, H, W)   # (bt, HW)
    _chunked_gate(x_ref, o_ref, attn, c_chunk)


def _sa_reduce_conv_kernel(w_ref, x_ref, attn_ref, sum_scr, max_scr, *,
                           H, W, c_total, c_chunk):
    """Two-pass mode, pass 1: accumulate sum/max over C blocks, finalize attn."""
    c_idx = pl.program_id(1)

    @pl.when(c_idx == 0)
    def _():
        sum_scr[...] = jnp.zeros_like(sum_scr)
        max_scr[...] = jnp.full_like(max_scr, -jnp.inf)

    bsum, bmax = _chunked_sum_max(x_ref, c_chunk)
    sum_scr[...] = sum_scr[...] + bsum
    max_scr[...] = jnp.maximum(max_scr[...], bmax)

    @pl.when(c_idx == pl.num_programs(1) - 1)
    def _():
        avg = sum_scr[...] * (1.0 / c_total)
        attn = _conv7x7_sigmoid(w_ref, avg, max_scr[...], H, W)   # (bt, HW)
        attn_ref[...] = attn[:, None, :]


def _sa_gate_kernel(attn_ref, x_ref, o_ref, *, c_chunk):
    """Two-pass mode, pass 2: y = attn * x (elementwise, fully parallel)."""
    attn = attn_ref[...][:, 0, :]                      # (bt, HW) f32
    _chunked_gate(x_ref, o_ref, attn, c_chunk)


# ----------------------------------------------------------------------------
# Blocking heuristics / wrapper
# ----------------------------------------------------------------------------
def _vmem_limit_bytes():
    try:
        phys = int(pltpu.get_tpu_info().vmem_capacity_bytes)
    except Exception:
        phys = 64 << 20
    # v5e/v6e (128 MiB) -> 64 MiB; v7x (64 MiB) -> 48 MiB.
    return int(min(64 << 20, (phys * 3) // 4))


def _pick_chunk(C, max_chunk=8):
    for d in range(min(C, max_chunk), 0, -1):
        if C % d == 0:
            return d
    return 1


def _pick_bt(B, bytes_per_b, hw, target_bytes):
    """Batch block: largest divisor of B under the block budget, preferring
    multiples of 8 (sublane width); split to >=2 grid steps only when that
    keeps 8-row alignment (pipelining + both v7x TensorCores)."""
    # Per-batch cost: HBM block bytes plus the ~20 (1, HW)-f32 intermediates
    # the tap loop keeps live (they spill to VMEM for large bt*HW).
    eff = max(bytes_per_b, 20 * hw * 4)
    cap = max(1, min(B, int(target_bytes) // max(eff, 1)))
    divisors = [d for d in range(1, B + 1) if B % d == 0 and d <= cap]
    aligned = [d for d in divisors if d % 8 == 0]
    bt = max(aligned) if aligned else max(divisors)
    if bt == B and B > 1:
        split = [d for d in divisors
                 if d < B and d >= min(B, 8) and (d % 8 == 0 or not aligned)]
        if split:
            bt = max(split)
    return bt


def _pick_ct(C, HW, itemsize, target_bytes):
    """Channel block for the two-pass path: divisor of C, multiple of 8
    (sublane tiling of the (ct, HW) block), roughly target_bytes of input."""
    cap = max(1, min(C, int(target_bytes) // max(HW * itemsize, 1)))
    fit = [d for d in range(1, C + 1) if C % d == 0 and d <= cap]
    aligned_fit = [d for d in fit if d % 8 == 0]
    if aligned_fit:
        return max(aligned_fit)
    aligned_all = [d for d in range(8, C + 1) if C % d == 0 and d % 8 == 0]
    if aligned_all:
        return min(aligned_all)
    return max(fit)


def _single_pass(x_flat, w_flat, H, W, max_block_bytes, vmem_limit):
    B, C, HW = x_flat.shape
    itemsize = x_flat.dtype.itemsize
    bt = _pick_bt(B, C * HW * itemsize, HW, max_block_bytes)
    c_chunk = _pick_chunk(C, 8)

    kernel = functools.partial(_sa_fused_kernel, H=H, W=W, c_chunk=c_chunk)
    return pl.pallas_call(
        kernel,
        out_shape=jax.ShapeDtypeStruct((B, C, HW), x_flat.dtype),
        grid_spec=pltpu.PrefetchScalarGridSpec(
            num_scalar_prefetch=0,
            grid=(B // bt,),
            in_specs=[
                pl.BlockSpec(memory_space=pltpu.MemorySpace.SMEM),   # weights
                pl.BlockSpec((bt, C, HW), lambda b: (b, 0, 0)),      # x block
            ],
            out_specs=pl.BlockSpec((bt, C, HW), lambda b: (b, 0, 0)),
        ),
        compiler_params=pltpu.CompilerParams(
            dimension_semantics=("parallel",),
            vmem_limit_bytes=vmem_limit,
        ),
    )(w_flat, x_flat)


def _two_pass(x_flat, w_flat, H, W, max_block_bytes, vmem_limit):
    B, C, HW = x_flat.shape
    itemsize = x_flat.dtype.itemsize
    ct = _pick_ct(C, HW, itemsize, max_block_bytes)
    n_c = C // ct
    c_chunk = _pick_chunk(ct, 8)

    # Pass 1: C-blocked channel reduce -> 7x7 conv -> sigmoid attention map.
    reduce_kernel = functools.partial(
        _sa_reduce_conv_kernel, H=H, W=W, c_total=C, c_chunk=c_chunk)
    attn = pl.pallas_call(
        reduce_kernel,
        out_shape=jax.ShapeDtypeStruct((B, 1, HW), jnp.float32),
        grid_spec=pltpu.PrefetchScalarGridSpec(
            num_scalar_prefetch=0,
            grid=(B, n_c),
            in_specs=[
                pl.BlockSpec(memory_space=pltpu.MemorySpace.SMEM),
                pl.BlockSpec((1, ct, HW), lambda b, c: (b, c, 0)),
            ],
            out_specs=pl.BlockSpec((1, 1, HW), lambda b, c: (b, 0, 0)),
            scratch_shapes=[pltpu.VMEM((1, HW), jnp.float32),
                            pltpu.VMEM((1, HW), jnp.float32)],
        ),
        compiler_params=pltpu.CompilerParams(
            dimension_semantics=("parallel", "arbitrary"),
            vmem_limit_bytes=vmem_limit,
        ),
    )(w_flat, x_flat)

    # Pass 2: elementwise gate, fully parallel over (B, C-blocks).
    gate_kernel = functools.partial(_sa_gate_kernel, c_chunk=c_chunk)
    return pl.pallas_call(
        gate_kernel,
        out_shape=jax.ShapeDtypeStruct((B, C, HW), x_flat.dtype),
        grid_spec=pltpu.PrefetchScalarGridSpec(
            num_scalar_prefetch=0,
            grid=(B, n_c),
            in_specs=[
                pl.BlockSpec((1, 1, HW), lambda b, c: (b, 0, 0)),    # attn
                pl.BlockSpec((1, ct, HW), lambda b, c: (b, c, 0)),   # x block
            ],
            out_specs=pl.BlockSpec((1, ct, HW), lambda b, c: (b, c, 0)),
        ),
        compiler_params=pltpu.CompilerParams(
            dimension_semantics=("parallel", "parallel"),
            vmem_limit_bytes=vmem_limit,
        ),
    )(attn, x_flat)


def spatial_attention(x, conv_weight, *, max_block_bytes=_DEFAULT_BLOCK_BYTES):
    """x: (B, C, H, W); conv_weight: (1, 2, 7, 7) f32 (PyTorch OIHW).

    Output has the same dtype as x (compute is f32 inside the kernel)."""
    B, C, H, W = x.shape
    HW = H * W
    x_flat = x.reshape(B, C, HW)                            # lane-dense last dim
    w_flat = conv_weight.reshape(-1).astype(jnp.float32)    # (2*7*7,)
    vmem_limit = _vmem_limit_bytes()
    bytes_per_b = C * HW * x.dtype.itemsize

    if bytes_per_b <= max_block_bytes:
        out_flat = _single_pass(x_flat, w_flat, H, W, max_block_bytes, vmem_limit)
    else:
        # One (C, H*W) slab does not fit the block budget: C-blocked two-pass.
        out_flat = _two_pass(x_flat, w_flat, H, W, max_block_bytes, vmem_limit)
    return out_flat.reshape(B, C, H, W)


# ----------------------------------------------------------------------------
# Plain-JAX reference
# ----------------------------------------------------------------------------
def spatial_attention_ref(x, conv_weight):
    avg = jnp.mean(x, axis=1, keepdims=True)
    mx = jnp.max(x, axis=1, keepdims=True)
    a = jnp.concatenate([avg, mx], axis=1)                  # (B, 2, H, W)
    conv = jax.lax.conv_general_dilated(
        a, conv_weight,
        window_strides=(1, 1),
        padding=[(PAD, PAD), (PAD, PAD)],
        dimension_numbers=("NCHW", "OIHW", "NCHW"),
    )                                                        # (B, 1, H, W)
    return jax.nn.sigmoid(conv) * x


if __name__ == "__main__":
    key = jax.random.PRNGKey(0)
    k1, k2, k3, kw = jax.random.split(key, 4)
    conv_weight = 0.1 * jax.random.normal(kw, (1, 2, KSIZE, KSIZE), dtype=jnp.float32)

    # 1) Base demo: single fused pass (whole C in one chunk).
    x1 = jax.random.normal(k1, (2, 4, 16, 16), dtype=jnp.float32)
    out1 = jax.block_until_ready(spatial_attention(x1, conv_weight))
    ref1 = jax.block_until_ready(spatial_attention_ref(x1, conv_weight))
    np.testing.assert_allclose(np.asarray(out1), np.asarray(ref1), rtol=1e-4, atol=1e-4)

    # 2) More channels: exercises the chunked in-kernel reduce / gate loops.
    x2 = jax.random.normal(k2, (2, 32, 16, 16), dtype=jnp.float32)
    out2 = jax.block_until_ready(spatial_attention(x2, conv_weight))
    ref2 = jax.block_until_ready(spatial_attention_ref(x2, conv_weight))
    np.testing.assert_allclose(np.asarray(out2), np.asarray(ref2), rtol=1e-4, atol=1e-4)

    # 3) Force the two-pass C-blocked fallback (large-activation path) at small shapes.
    x3 = jax.random.normal(k3, (2, 16, 16, 16), dtype=jnp.float32)
    out3 = jax.block_until_ready(
        spatial_attention(x3, conv_weight, max_block_bytes=8 * 1024))
    ref3 = jax.block_until_ready(spatial_attention_ref(x3, conv_weight))
    np.testing.assert_allclose(np.asarray(out3), np.asarray(ref3), rtol=1e-4, atol=1e-4)

    # 4) bf16 I/O: output dtype follows the input dtype.
    x4 = x1.astype(jnp.bfloat16)
    out4 = jax.block_until_ready(spatial_attention(x4, conv_weight))
    assert out4.dtype == jnp.bfloat16
    ref4 = jax.block_until_ready(
        spatial_attention_ref(x4.astype(jnp.float32), conv_weight))
    np.testing.assert_allclose(np.asarray(out4).astype(np.float32), np.asarray(ref4),
                               rtol=2e-2, atol=2e-2)

    print("KERNEL_OK")
</pallas_src>

<mosaic_0001>
module attributes {stable_mosaic.version = 11 : i64} {
  func.func @_sa_fused_kernel(%arg0: i32, %arg1: memref<98xf32, #tpu.memory_space<smem>>, %arg2: memref<2x4x256xf32, #tpu.memory_space<vmem>>, %arg3: memref<2x4x256xf32, #tpu.memory_space<vmem>>) attributes {dimension_semantics = [#tpu.dimension_semantics<parallel>], iteration_bounds = array<i64: 1>, scalar_prefetch = 0 : i64, scratch_operands = 0 : i64, tpu.core_type = #tpu.core_type<tc>, window_params = [{transform_indices = @transform_0, window_bounds = array<i64: 98>}, {transform_indices = @transform_1, window_bounds = array<i64: 2, 4, 256>}, {transform_indices = @transform_2, window_bounds = array<i64: 2, 4, 256>}]} {
    %c0 = arith.constant 0 : index
    %c0_0 = arith.constant 0 : index
    %c0_1 = arith.constant 0 : index
    %0 = vector.load %arg2[%c0, %c0_0, %c0_1] : memref<2x4x256xf32, #tpu.memory_space<vmem>>, vector<2x4x256xf32>
    %cst = arith.constant dense<0.000000e+00> : vector<2x256xf32>
    %1 = vector.multi_reduction <add>, %0, %cst [1] : vector<2x4x256xf32> to vector<2x256xf32>
    %cst_2 = arith.constant dense<0xFF800000> : vector<2x256xf32>
    %2 = vector.multi_reduction <maximumf>, %0, %cst_2 [1] : vector<2x4x256xf32> to vector<2x256xf32>
    %cst_3 = arith.constant 2.500000e-01 : f32
    %3 = vector.broadcast %cst_3 : f32 to vector<2x256xf32>
    %4 = arith.mulf %1, %3 : vector<2x256xf32>
    %5 = tpu.iota {dimensions = array<i32: 1>} : vector<2x256xi32>
    %c15_i32 = arith.constant 15 : i32
    %6 = vector.broadcast %c15_i32 : i32 to vector<2x256xi32>
    %7 = arith.andi %5, %6 : vector<2x256xi32>
    %c48_i32 = arith.constant 48 : i32
    %8 = vector.broadcast %c48_i32 : i32 to vector<2x256xi32>
    %9 = arith.cmpi sge, %5, %8 : vector<2x256xi32>
    %c3_i32 = arith.constant 3 : i32
    %10 = vector.broadcast %c3_i32 : i32 to vector<2x256xi32>
    %11 = arith.cmpi sge, %7, %10 : vector<2x256xi32>
    %c32_i32 = arith.constant 32 : i32
    %12 = vector.broadcast %c32_i32 : i32 to vector<2x256xi32>
    %13 = arith.cmpi sge, %5, %12 : vector<2x256xi32>
    %c2_i32 = arith.constant 2 : i32
    %14 = vector.broadcast %c2_i32 : i32 to vector<2x256xi32>
    %15 = arith.cmpi sge, %7, %14 : vector<2x256xi32>
    %c16_i32 = arith.constant 16 : i32
    %16 = vector.broadcast %c16_i32 : i32 to vector<2x256xi32>
    %17 = arith.cmpi sge, %5, %16 : vector<2x256xi32>
    %c1_i32 = arith.constant 1 : i32
    %18 = vector.broadcast %c1_i32 : i32 to vector<2x256xi32>
    %19 = arith.cmpi sge, %7, %18 : vector<2x256xi32>
    %c240_i32 = arith.constant 240 : i32
    %20 = vector.broadcast %c240_i32 : i32 to vector<2x256xi32>
    %21 = arith.cmpi slt, %5, %20 : vector<2x256xi32>
    %c15_i32_4 = arith.constant 15 : i32
    %22 = vector.broadcast %c15_i32_4 : i32 to vector<2x256xi32>
    %23 = arith.cmpi slt, %7, %22 : vector<2x256xi32>
    %c224_i32 = arith.constant 224 : i32
    %24 = vector.broadcast %c224_i32 : i32 to vector<2x256xi32>
    %25 = arith.cmpi slt, %5, %24 : vector<2x256xi32>
    %c14_i32 = arith.constant 14 : i32
    %26 = vector.broadcast %c14_i32 : i32 to vector<2x256xi32>
    %27 = arith.cmpi slt, %7, %26 : vector<2x256xi32>
    %c208_i32 = arith.constant 208 : i32
    %28 = vector.broadcast %c208_i32 : i32 to vector<2x256xi32>
    %29 = arith.cmpi slt, %5, %28 : vector<2x256xi32>
    %c13_i32 = arith.constant 13 : i32
    %30 = vector.broadcast %c13_i32 : i32 to vector<2x256xi32>
    %31 = arith.cmpi slt, %7, %30 : vector<2x256xi32>
    %cst_5 = arith.constant 0.000000e+00 : f32
    %32 = vector.broadcast %cst_5 : f32 to vector<2x256xf32>
    %c0_6 = arith.constant 0 : index
    %33 = memref.load %arg1[%c0_6] : memref<98xf32, #tpu.memory_space<smem>>
    %c49 = arith.constant 49 : index
    %34 = memref.load %arg1[%c49] : memref<98xf32, #tpu.memory_space<smem>>
    %35 = vector.broadcast %33 : f32 to vector<2x256xf32>
    %36 = arith.mulf %4, %35 : vector<2x256xf32>
    %37 = vector.broadcast %34 : f32 to vector<2x256xf32>
    %38 = arith.mulf %2, %37 : vector<2x256xf32>
    %39 = arith.addf %36, %38 : vector<2x256xf32>
    %c51_i32 = arith.constant 51 : i32
    %40 = tpu.dynamic_rotate %39 by %c51_i32 dim 1 : vector<2x256xf32>, i32 -> vector<2x256xf32>
    %41 = arith.andi %9, %11 : vector<2x256xi1>
    %cst_7 = arith.constant 0.000000e+00 : f32
    %42 = vector.broadcast %cst_7 : f32 to vector<2x256xf32>
    %43 = arith.select %41, %40, %42 : vector<2x256xi1>, vector<2x256xf32>
    %44 = arith.addf %32, %43 : vector<2x256xf32>
    %c1 = arith.constant 1 : index
    %45 = memref.load %arg1[%c1] : memref<98xf32, #tpu.memory_space<smem>>
    %c50 = arith.constant 50 : index
    %46 = memref.load %arg1[%c50] : memref<98xf32, #tpu.memory_space<smem>>
    %47 = vector.broadcast %45 : f32 to vector<2x256xf32>
    %48 = arith.mulf %4, %47 : vector<2x256xf32>
    %49 = vector.broadcast %46 : f32 to vector<2x256xf32>
    %50 = arith.mulf %2, %49 : vector<2x256xf32>
    %51 = arith.addf %48, %50 : vector<2x256xf32>
    %c50_i32 = arith.constant 50 : i32
    %52 = tpu.dynamic_rotate %51 by %c50_i32 dim 1 : vector<2x256xf32>, i32 -> vector<2x256xf32>
    %53 = arith.andi %9, %15 : vector<2x256xi1>
    %cst_8 = arith.constant 0.000000e+00 : f32
    %54 = vector.broadcast %cst_8 : f32 to vector<2x256xf32>
    %55 = arith.select %53, %52, %54 : vector<2x256xi1>, vector<2x256xf32>
    %56 = arith.addf %44, %55 : vector<2x256xf32>
    %c2 = arith.constant 2 : index
    %57 = memref.load %arg1[%c2] : memref<98xf32, #tpu.memory_space<smem>>
    %c51 = arith.constant 51 : index
    %58 = memref.load %arg1[%c51] : memref<98xf32, #tpu.memory_space<smem>>
    %59 = vector.broadcast %57 : f32 to vector<2x256xf32>
    %60 = arith.mulf %4, %59 : vector<2x256xf32>
    %61 = vector.broadcast %58 : f32 to vector<2x256xf32>
    %62 = arith.mulf %2, %61 : vector<2x256xf32>
    %63 = arith.addf %60, %62 : vector<2x256xf32>
    %c49_i32 = arith.constant 49 : i32
    %64 = tpu.dynamic_rotate %63 by %c49_i32 dim 1 : vector<2x256xf32>, i32 -> vector<2x256xf32>
    %65 = arith.andi %9, %19 : vector<2x256xi1>
    %cst_9 = arith.constant 0.000000e+00 : f32
    %66 = vector.broadcast %cst_9 : f32 to vector<2x256xf32>
    %67 = arith.select %65, %64, %66 : vector<2x256xi1>, vector<2x256xf32>
    %68 = arith.addf %56, %67 : vector<2x256xf32>
    %c3 = arith.constant 3 : index
    %69 = memref.load %arg1[%c3] : memref<98xf32, #tpu.memory_space<smem>>
    %c52 = arith.constant 52 : index
    %70 = memref.load %arg1[%c52] : memref<98xf32, #tpu.memory_space<smem>>
    %71 = vector.broadcast %69 : f32 to vector<2x256xf32>
    %72 = arith.mulf %4, %71 : vector<2x256xf32>
    %73 = vector.broadcast %70 : f32 to vector<2x256xf32>
    %74 = arith.mulf %2, %73 : vector<2x256xf32>
    %75 = arith.addf %72, %74 : vector<2x256xf32>
    %c48_i32_10 = arith.constant 48 : i32
    %76 = tpu.dynamic_rotate %75 by %c48_i32_10 dim 1 : vector<2x256xf32>, i32 -> vector<2x256xf32>
    %cst_11 = arith.constant 0.000000e+00 : f32
    %77 = vector.broadcast %cst_11 : f32 to vector<2x256xf32>
    %78 = arith.select %9, %76, %77 : vector<2x256xi1>, vector<2x256xf32>
    %79 = arith.addf %68, %78 : vector<2x256xf32>
    %c4 = arith.constant 4 : index
    %80 = memref.load %arg1[%c4] : memref<98xf32, #tpu.memory_space<smem>>
    %c53 = arith.constant 53 : index
    %81 = memref.load %arg1[%c53] : memref<98xf32, #tpu.memory_space<smem>>
    %82 = vector.broadcast %80 : f32 to vector<2x256xf32>
    %83 = arith.mulf %4, %82 : vector<2x256xf32>
    %84 = vector.broadcast %81 : f32 to vector<2x256xf32>
    %85 = arith.mulf %2, %84 : vector<2x256xf32>
    %86 = arith.addf %83, %85 : vector<2x256xf32>
    %c47_i32 = arith.constant 47 : i32
    %87 = tpu.dynamic_rotate %86 by %c47_i32 dim 1 : vector<2x256xf32>, i32 -> vector<2x256xf32>
    %88 = arith.andi %9, %23 : vector<2x256xi1>
    %cst_12 = arith.constant 0.000000e+00 : f32
    %89 = vector.broadcast %cst_12 : f32 to vector<2x256xf32>
    %90 = arith.select %88, %87, %89 : vector<2x256xi1>, vector<2x256xf32>
    %91 = arith.addf %79, %90 : vector<2x256xf32>
    %c5 = arith.constant 5 : index
    %92 = memref.load %arg1[%c5] : memref<98xf32, #tpu.memory_space<smem>>
    %c54 = arith.constant 54 : index
    %93 = memref.load %arg1[%c54] : memref<98xf32, #tpu.memory_space<smem>>
    %94 = vector.broadcast %92 : f32 to vector<2x256xf32>
    %95 = arith.mulf %4, %94 : vector<2x256xf32>
    %96 = vector.broadcast %93 : f32 to vector<2x256xf32>
    %97 = arith.mulf %2, %96 : vector<2x256xf32>
    %98 = arith.addf %95, %97 : vector<2x256xf32>
    %c46_i32 = arith.constant 46 : i32
    %99 = tpu.dynamic_rotate %98 by %c46_i32 dim 1 : vector<2x256xf32>, i32 -> vector<2x256xf32>
    %100 = arith.andi %9, %27 : vector<2x256xi1>
    %cst_13 = arith.constant 0.000000e+00 : f32
    %101 = vector.broadcast %cst_13 : f32 to vector<2x256xf32>
    %102 = arith.select %100, %99, %101 : vector<2x256xi1>, vector<2x256xf32>
    %103 = arith.addf %91, %102 : vector<2x256xf32>
    %c6 = arith.constant 6 : index
    %104 = memref.load %arg1[%c6] : memref<98xf32, #tpu.memory_space<smem>>
    %c55 = arith.constant 55 : index
    %105 = memref.load %arg1[%c55] : memref<98xf32, #tpu.memory_space<smem>>
    %106 = vector.broadcast %104 : f32 to vector<2x256xf32>
    %107 = arith.mulf %4, %106 : vector<2x256xf32>
    %108 = vector.broadcast %105 : f32 to vector<2x256xf32>
    %109 = arith.mulf %2, %108 : vector<2x256xf32>
    %110 = arith.addf %107, %109 : vector<2x256xf32>
    %c45_i32 = arith.constant 45 : i32
    %111 = tpu.dynamic_rotate %110 by %c45_i32 dim 1 : vector<2x256xf32>, i32 -> vector<2x256xf32>
    %112 = arith.andi %9, %31 : vector<2x256xi1>
    %cst_14 = arith.constant 0.000000e+00 : f32
    %113 = vector.broadcast %cst_14 : f32 to vector<2x256xf32>
    %114 = arith.select %112, %111, %113 : vector<2x256xi1>, vector<2x256xf32>
    %115 = arith.addf %103, %114 : vector<2x256xf32>
    %c7 = arith.constant 7 : index
    %116 = memref.load %arg1[%c7] : memref<98xf32, #tpu.memory_space<smem>>
    %c56 = arith.constant 56 : index
    %117 = memref.load %arg1[%c56] : memref<98xf32, #tpu.memory_space<smem>>
    %118 = vector.broadcast %116 : f32 to vector<2x256xf32>
    %119 = arith.mulf %4, %118 : vector<2x256xf32>
    %120 = vector.broadcast %117 : f32 to vector<2x256xf32>
    %121 = arith.mulf %2, %120 : vector<2x256xf32>
    %122 = arith.addf %119, %121 : vector<2x256xf32>
    %c35_i32 = arith.constant 35 : i32
    %123 = tpu.dynamic_rotate %122 by %c35_i32 dim 1 : vector<2x256xf32>, i32 -> vector<2x256xf32>
    %124 = arith.andi %13, %11 : vector<2x256xi1>
    %cst_15 = arith.constant 0.000000e+00 : f32
    %125 = vector.broadcast %cst_15 : f32 to vector<2x256xf32>
    %126 = arith.select %124, %123, %125 : vector<2x256xi1>, vector<2x256xf32>
    %127 = arith.addf %115, %126 : vector<2x256xf32>
    %c8 = arith.constant 8 : index
    %128 = memref.load %arg1[%c8] : memref<98xf32, #tpu.memory_space<smem>>
    %c57 = arith.constant 57 : index
    %129 = memref.load %arg1[%c57] : memref<98xf32, #tpu.memory_space<smem>>
    %130 = vector.broadcast %128 : f32 to vector<2x256xf32>
    %131 = arith.mulf %4, %130 : vector<2x256xf32>
    %132 = vector.broadcast %129 : f32 to vector<2x256xf32>
    %133 = arith.mulf %2, %132 : vector<2x256xf32>
    %134 = arith.addf %131, %133 : vector<2x256xf32>
    %c34_i32 = arith.constant 34 : i32
    %135 = tpu.dynamic_rotate %134 by %c34_i32 dim 1 : vector<2x256xf32>, i32 -> vector<2x256xf32>
    %136 = arith.andi %13, %15 : vector<2x256xi1>
    %cst_16 = arith.constant 0.000000e+00 : f32
    %137 = vector.broadcast %cst_16 : f32 to vector<2x256xf32>
    %138 = arith.select %136, %135, %137 : vector<2x256xi1>, vector<2x256xf32>
    %139 = arith.addf %127, %138 : vector<2x256xf32>
    %c9 = arith.constant 9 : index
    %140 = memref.load %arg1[%c9] : memref<98xf32, #tpu.memory_space<smem>>
    %c58 = arith.constant 58 : index
    %141 = memref.load %arg1[%c58] : memref<98xf32, #tpu.memory_space<smem>>
    %142 = vector.broadcast %140 : f32 to vector<2x256xf32>
    %143 = arith.mulf %4, %142 : vector<2x256xf32>
    %144 = vector.broadcast %141 : f32 to vector<2x256xf32>
    %145 = arith.mulf %2, %144 : vector<2x256xf32>
    %146 = arith.addf %143, %145 : vector<2x256xf32>
    %c33_i32 = arith.constant 33 : i32
    %147 = tpu.dynamic_rotate %146 by %c33_i32 dim 1 : vector<2x256xf32>, i32 -> vector<2x256xf32>
    %148 = arith.andi %13, %19 : vector<2x256xi1>
    %cst_17 = arith.constant 0.000000e+00 : f32
    %149 = vector.broadcast %cst_17 : f32 to vector<2x256xf32>
    %150 = arith.select %148, %147, %149 : vector<2x256xi1>, vector<2x256xf32>
    %151 = arith.addf %139, %150 : vector<2x256xf32>
    %c10 = arith.constant 10 : index
    %152 = memref.load %arg1[%c10] : memref<98xf32, #tpu.memory_space<smem>>
    %c59 = arith.constant 59 : index
    %153 = memref.load %arg1[%c59] : memref<98xf32, #tpu.memory_space<smem>>
    %154 = vector.broadcast %152 : f32 to vector<2x256xf32>
    %155 = arith.mulf %4, %154 : vector<2x256xf32>
    %156 = vector.broadcast %153 : f32 to vector<2x256xf32>
    %157 = arith.mulf %2, %156 : vector<2x256xf32>
    %158 = arith.addf %155, %157 : vector<2x256xf32>
    %c32_i32_18 = arith.constant 32 : i32
    %159 = tpu.dynamic_rotate %158 by %c32_i32_18 dim 1 : vector<2x256xf32>, i32 -> vector<2x256xf32>
    %cst_19 = arith.constant 0.000000e+00 : f32
    %160 = vector.broadcast %cst_19 : f32 to vector<2x256xf32>
    %161 = arith.select %13, %159, %160 : vector<2x256xi1>, vector<2x256xf32>
    %162 = arith.addf %151, %161 : vector<2x256xf32>
    %c11 = arith.constant 11 : index
    %163 = memref.load %arg1[%c11] : memref<98xf32, #tpu.memory_space<smem>>
    %c60 = arith.constant 60 : index
    %164 = memref.load %arg1[%c60] : memref<98xf32, #tpu.memory_space<smem>>
    %165 = vector.broadcast %163 : f32 to vector<2x256xf32>
    %166 = arith.mulf %4, %165 : vector<2x256xf32>
    %167 = vector.broadcast %164 : f32 to vector<2x256xf32>
    %168 = arith.mulf %2, %167 : vector<2x256xf32>
    %169 = arith.addf %166, %168 : vector<2x256xf32>
    %c31_i32 = arith.constant 31 : i32
    %170 = tpu.dynamic_rotate %169 by %c31_i32 dim 1 : vector<2x256xf32>, i32 -> vector<2x256xf32>
    %171 = arith.andi %13, %23 : vector<2x256xi1>
    %cst_20 = arith.constant 0.000000e+00 : f32
    %172 = vector.broadcast %cst_20 : f32 to vector<2x256xf32>
    %173 = arith.select %171, %170, %172 : vector<2x256xi1>, vector<2x256xf32>
    %174 = arith.addf %162, %173 : vector<2x256xf32>
    %c12 = arith.constant 12 : index
    %175 = memref.load %arg1[%c12] : memref<98xf32, #tpu.memory_space<smem>>
    %c61 = arith.constant 61 : index
    %176 = memref.load %arg1[%c61] : memref<98xf32, #tpu.memory_space<smem>>
    %177 = vector.broadcast %175 : f32 to vector<2x256xf32>
    %178 = arith.mulf %4, %177 : vector<2x256xf32>
    %179 = vector.broadcast %176 : f32 to vector<2x256xf32>
    %180 = arith.mulf %2, %179 : vector<2x256xf32>
    %181 = arith.addf %178, %180 : vector<2x256xf32>
    %c30_i32 = arith.constant 30 : i32
    %182 = tpu.dynamic_rotate %181 by %c30_i32 dim 1 : vector<2x256xf32>, i32 -> vector<2x256xf32>
    %183 = arith.andi %13, %27 : vector<2x256xi1>
    %cst_21 = arith.constant 0.000000e+00 : f32
    %184 = vector.broadcast %cst_21 : f32 to vector<2x256xf32>
    %185 = arith.select %183, %182, %184 : vector<2x256xi1>, vector<2x256xf32>
    %186 = arith.addf %174, %185 : vector<2x256xf32>
    %c13 = arith.constant 13 : index
    %187 = memref.load %arg1[%c13] : memref<98xf32, #tpu.memory_space<smem>>
    %c62 = arith.constant 62 : index
    %188 = memref.load %arg1[%c62] : memref<98xf32, #tpu.memory_space<smem>>
    %189 = vector.broadcast %187 : f32 to vector<2x256xf32>
    %190 = arith.mulf %4, %189 : vector<2x256xf32>
    %191 = vector.broadcast %188 : f32 to vector<2x256xf32>
    %192 = arith.mulf %2, %191 : vector<2x256xf32>
    %193 = arith.addf %190, %192 : vector<2x256xf32>
    %c29_i32 = arith.constant 29 : i32
    %194 = tpu.dynamic_rotate %193 by %c29_i32 dim 1 : vector<2x256xf32>, i32 -> vector<2x256xf32>
    %195 = arith.andi %13, %31 : vector<2x256xi1>
    %cst_22 = arith.constant 0.000000e+00 : f32
    %196 = vector.broadcast %cst_22 : f32 to vector<2x256xf32>
    %197 = arith.select %195, %194, %196 : vector<2x256xi1>, vector<2x256xf32>
    %198 = arith.addf %186, %197 : vector<2x256xf32>
    %c14 = arith.constant 14 : index
    %199 = memref.load %arg1[%c14] : memref<98xf32, #tpu.memory_space<smem>>
    %c63 = arith.constant 63 : index
    %200 = memref.load %arg1[%c63] : memref<98xf32, #tpu.memory_space<smem>>
    %201 = vector.broadcast %199 : f32 to vector<2x256xf32>
    %202 = arith.mulf %4, %201 : vector<2x256xf32>
    %203 = vector.broadcast %200 : f32 to vector<2x256xf32>
    %204 = arith.mulf %2, %203 : vector<2x256xf32>
    %205 = arith.addf %202, %204 : vector<2x256xf32>
    %c19_i32 = arith.constant 19 : i32
    %206 = tpu.dynamic_rotate %205 by %c19_i32 dim 1 : vector<2x256xf32>, i32 -> vector<2x256xf32>
    %207 = arith.andi %17, %11 : vector<2x256xi1>
    %cst_23 = arith.constant 0.000000e+00 : f32
    %208 = vector.broadcast %cst_23 : f32 to vector<2x256xf32>
    %209 = arith.select %207, %206, %208 : vector<2x256xi1>, vector<2x256xf32>
    %210 = arith.addf %198, %209 : vector<2x256xf32>
    %c15 = arith.constant 15 : index
    %211 = memref.load %arg1[%c15] : memref<98xf32, #tpu.memory_space<smem>>
    %c64 = arith.constant 64 : index
    %212 = memref.load %arg1[%c64] : memref<98xf32, #tpu.memory_space<smem>>
    %213 = vector.broadcast %211 : f32 to vector<2x256xf32>
    %214 = arith.mulf %4, %213 : vector<2x256xf32>
    %215 = vector.broadcast %212 : f32 to vector<2x256xf32>
    %216 = arith.mulf %2, %215 : vector<2x256xf32>
    %217 = arith.addf %214, %216 : vector<2x256xf32>
    %c18_i32 = arith.constant 18 : i32
    %218 = tpu.dynamic_rotate %217 by %c18_i32 dim 1 : vector<2x256xf32>, i32 -> vector<2x256xf32>
    %219 = arith.andi %17, %15 : vector<2x256xi1>
    %cst_24 = arith.constant 0.000000e+00 : f32
    %220 = vector.broadcast %cst_24 : f32 to vector<2x256xf32>
    %221 = arith.select %219, %218, %220 : vector<2x256xi1>, vector<2x256xf32>
    %222 = arith.addf %210, %221 : vector<2x256xf32>
    %c16 = arith.constant 16 : index
    %223 = memref.load %arg1[%c16] : memref<98xf32, #tpu.memory_space<smem>>
    %c65 = arith.constant 65 : index
    %224 = memref.load %arg1[%c65] : memref<98xf32, #tpu.memory_space<smem>>
    %225 = vector.broadcast %223 : f32 to vector<2x256xf32>
    %226 = arith.mulf %4, %225 : vector<2x256xf32>
    %227 = vector.broadcast %224 : f32 to vector<2x256xf32>
    %228 = arith.mulf %2, %227 : vector<2x256xf32>
    %229 = arith.addf %226, %228 : vector<2x256xf32>
    %c17_i32 = arith.constant 17 : i32
    %230 = tpu.dynamic_rotate %229 by %c17_i32 dim 1 : vector<2x256xf32>, i32 -> vector<2x256xf32>
    %231 = arith.andi %17, %19 : vector<2x256xi1>
    %cst_25 = arith.constant 0.000000e+00 : f32
    %232 = vector.broadcast %cst_25 : f32 to vector<2x256xf32>
    %233 = arith.select %231, %230, %232 : vector<2x256xi1>, vector<2x256xf32>
    %234 = arith.addf %222, %233 : vector<2x256xf32>
    %c17 = arith.constant 17 : index
    %235 = memref.load %arg1[%c17] : memref<98xf32, #tpu.memory_space<smem>>
    %c66 = arith.constant 66 : index
    %236 = memref.load %arg1[%c66] : memref<98xf32, #tpu.memory_space<smem>>
    %237 = vector.broadcast %235 : f32 to vector<2x256xf32>
    %238 = arith.mulf %4, %237 : vector<2x256xf32>
    %239 = vector.broadcast %236 : f32 to vector<2x256xf32>
    %240 = arith.mulf %2, %239 : vector<2x256xf32>
    %241 = arith.addf %238, %240 : vector<2x256xf32>
    %c16_i32_26 = arith.constant 16 : i32
    %242 = tpu.dynamic_rotate %241 by %c16_i32_26 dim 1 : vector<2x256xf32>, i32 -> vector<2x256xf32>
    %cst_27 = arith.constant 0.000000e+00 : f32
    %243 = vector.broadcast %cst_27 : f32 to vector<2x256xf32>
    %244 = arith.select %17, %242, %243 : vector<2x256xi1>, vector<2x256xf32>
    %245 = arith.addf %234, %244 : vector<2x256xf32>
    %c18 = arith.constant 18 : index
    %246 = memref.load %arg1[%c18] : memref<98xf32, #tpu.memory_space<smem>>
    %c67 = arith.constant 67 : index
    %247 = memref.load %arg1[%c67] : memref<98xf32, #tpu.memory_space<smem>>
    %248 = vector.broadcast %246 : f32 to vector<2x256xf32>
    %249 = arith.mulf %4, %248 : vector<2x256xf32>
    %250 = vector.broadcast %247 : f32 to vector<2x256xf32>
    %251 = arith.mulf %2, %250 : vector<2x256xf32>
    %252 = arith.addf %249, %251 : vector<2x256xf32>
    %c15_i32_28 = arith.constant 15 : i32
    %253 = tpu.dynamic_rotate %252 by %c15_i32_28 dim 1 : vector<2x256xf32>, i32 -> vector<2x256xf32>
    %254 = arith.andi %17, %23 : vector<2x256xi1>
    %cst_29 = arith.constant 0.000000e+00 : f32
    %255 = vector.broadcast %cst_29 : f32 to vector<2x256xf32>
    %256 = arith.select %254, %253, %255 : vector<2x256xi1>, vector<2x256xf32>
    %257 = arith.addf %245, %256 : vector<2x256xf32>
    %c19 = arith.constant 19 : index
    %258 = memref.load %arg1[%c19] : memref<98xf32, #tpu.memory_space<smem>>
    %c68 = arith.constant 68 : index
    %259 = memref.load %arg1[%c68] : memref<98xf32, #tpu.memory_space<smem>>
    %260 = vector.broadcast %258 : f32 to vector<2x256xf32>
    %261 = arith.mulf %4, %260 : vector<2x256xf32>
    %262 = vector.broadcast %259 : f32 to vector<2x256xf32>
    %263 = arith.mulf %2, %262 : vector<2x256xf32>
    %264 = arith.addf %261, %263 : vector<2x256xf32>
    %c14_i32_30 = arith.constant 14 : i32
    %265 = tpu.dynamic_rotate %264 by %c14_i32_30 dim 1 : vector<2x256xf32>, i32 -> vector<2x256xf32>
    %266 = arith.andi %17, %27 : vector<2x256xi1>
    %cst_31 = arith.constant 0.000000e+00 : f32
    %267 = vector.broadcast %cst_31 : f32 to vector<2x256xf32>
    %268 = arith.select %266, %265, %267 : vector<2x256xi1>, vector<2x256xf32>
    %269 = arith.addf %257, %268 : vector<2x256xf32>
    %c20 = arith.constant 20 : index
    %270 = memref.load %arg1[%c20] : memref<98xf32, #tpu.memory_space<smem>>
    %c69 = arith.constant 69 : index
    %271 = memref.load %arg1[%c69] : memref<98xf32, #tpu.memory_space<smem>>
    %272 = vector.broadcast %270 : f32 to vector<2x256xf32>
    %273 = arith.mulf %4, %272 : vector<2x256xf32>
    %274 = vector.broadcast %271 : f32 to vector<2x256xf32>
    %275 = arith.mulf %2, %274 : vector<2x256xf32>
    %276 = arith.addf %273, %275 : vector<2x256xf32>
    %c13_i32_32 = arith.constant 13 : i32
    %277 = tpu.dynamic_rotate %276 by %c13_i32_32 dim 1 : vector<2x256xf32>, i32 -> vector<2x256xf32>
    %278 = arith.andi %17, %31 : vector<2x256xi1>
    %cst_33 = arith.constant 0.000000e+00 : f32
    %279 = vector.broadcast %cst_33 : f32 to vector<2x256xf32>
    %280 = arith.select %278, %277, %279 : vector<2x256xi1>, vector<2x256xf32>
    %281 = arith.addf %269, %280 : vector<2x256xf32>
    %c21 = arith.constant 21 : index
    %282 = memref.load %arg1[%c21] : memref<98xf32, #tpu.memory_space<smem>>
    %c70 = arith.constant 70 : index
    %283 = memref.load %arg1[%c70] : memref<98xf32, #tpu.memory_space<smem>>
    %284 = vector.broadcast %282 : f32 to vector<2x256xf32>
    %285 = arith.mulf %4, %284 : vector<2x256xf32>
    %286 = vector.broadcast %283 : f32 to vector<2x256xf32>
    %287 = arith.mulf %2, %286 : vector<2x256xf32>
    %288 = arith.addf %285, %287 : vector<2x256xf32>
    %c3_i32_34 = arith.constant 3 : i32
    %289 = tpu.dynamic_rotate %288 by %c3_i32_34 dim 1 : vector<2x256xf32>, i32 -> vector<2x256xf32>
    %cst_35 = arith.constant 0.000000e+00 : f32
    %290 = vector.broadcast %cst_35 : f32 to vector<2x256xf32>
    %291 = arith.select %11, %289, %290 : vector<2x256xi1>, vector<2x256xf32>
    %292 = arith.addf %281, %291 : vector<2x256xf32>
    %c22 = arith.constant 22 : index
    %293 = memref.load %arg1[%c22] : memref<98xf32, #tpu.memory_space<smem>>
    %c71 = arith.constant 71 : index
    %294 = memref.load %arg1[%c71] : memref<98xf32, #tpu.memory_space<smem>>
    %295 = vector.broadcast %293 : f32 to vector<2x256xf32>
    %296 = arith.mulf %4, %295 : vector<2x256xf32>
    %297 = vector.broadcast %294 : f32 to vector<2x256xf32>
    %298 = arith.mulf %2, %297 : vector<2x256xf32>
    %299 = arith.addf %296, %298 : vector<2x256xf32>
    %c2_i32_36 = arith.constant 2 : i32
    %300 = tpu.dynamic_rotate %299 by %c2_i32_36 dim 1 : vector<2x256xf32>, i32 -> vector<2x256xf32>
    %cst_37 = arith.constant 0.000000e+00 : f32
    %301 = vector.broadcast %cst_37 : f32 to vector<2x256xf32>
    %302 = arith.select %15, %300, %301 : vector<2x256xi1>, vector<2x256xf32>
    %303 = arith.addf %292, %302 : vector<2x256xf32>
    %c23 = arith.constant 23 : index
    %304 = memref.load %arg1[%c23] : memref<98xf32, #tpu.memory_space<smem>>
    %c72 = arith.constant 72 : index
    %305 = memref.load %arg1[%c72] : memref<98xf32, #tpu.memory_space<smem>>
    %306 = vector.broadcast %304 : f32 to vector<2x256xf32>
    %307 = arith.mulf %4, %306 : vector<2x256xf32>
    %308 = vector.broadcast %305 : f32 to vector<2x256xf32>
    %309 = arith.mulf %2, %308 : vector<2x256xf32>
    %310 = arith.addf %307, %309 : vector<2x256xf32>
    %c1_i32_38 = arith.constant 1 : i32
    %311 = tpu.dynamic_rotate %310 by %c1_i32_38 dim 1 : vector<2x256xf32>, i32 -> vector<2x256xf32>
    %cst_39 = arith.constant 0.000000e+00 : f32
    %312 = vector.broadcast %cst_39 : f32 to vector<2x256xf32>
    %313 = arith.select %19, %311, %312 : vector<2x256xi1>, vector<2x256xf32>
    %314 = arith.addf %303, %313 : vector<2x256xf32>
    %c24 = arith.constant 24 : index
    %315 = memref.load %arg1[%c24] : memref<98xf32, #tpu.memory_space<smem>>
    %c73 = arith.constant 73 : index
    %316 = memref.load %arg1[%c73] : memref<98xf32, #tpu.memory_space<smem>>
    %317 = vector.broadcast %315 : f32 to vector<2x256xf32>
    %318 = arith.mulf %4, %317 : vector<2x256xf32>
    %319 = vector.broadcast %316 : f32 to vector<2x256xf32>
    %320 = arith.mulf %2, %319 : vector<2x256xf32>
    %321 = arith.addf %318, %320 : vector<2x256xf32>
    %322 = arith.addf %314, %321 : vector<2x256xf32>
    %c25 = arith.constant 25 : index
    %323 = memref.load %arg1[%c25] : memref<98xf32, #tpu.memory_space<smem>>
    %c74 = arith.constant 74 : index
    %324 = memref.load %arg1[%c74] : memref<98xf32, #tpu.memory_space<smem>>
    %325 = vector.broadcast %323 : f32 to vector<2x256xf32>
    %326 = arith.mulf %4, %325 : vector<2x256xf32>
    %327 = vector.broadcast %324 : f32 to vector<2x256xf32>
    %328 = arith.mulf %2, %327 : vector<2x256xf32>
    %329 = arith.addf %326, %328 : vector<2x256xf32>
    %c255_i32 = arith.constant 255 : i32
    %330 = tpu.dynamic_rotate %329 by %c255_i32 dim 1 : vector<2x256xf32>, i32 -> vector<2x256xf32>
    %cst_40 = arith.constant 0.000000e+00 : f32
    %331 = vector.broadcast %cst_40 : f32 to vector<2x256xf32>
    %332 = arith.select %23, %330, %331 : vector<2x256xi1>, vector<2x256xf32>
    %333 = arith.addf %322, %332 : vector<2x256xf32>
    %c26 = arith.constant 26 : index
    %334 = memref.load %arg1[%c26] : memref<98xf32, #tpu.memory_space<smem>>
    %c75 = arith.constant 75 : index
    %335 = memref.load %arg1[%c75] : memref<98xf32, #tpu.memory_space<smem>>
    %336 = vector.broadcast %334 : f32 to vector<2x256xf32>
    %337 = arith.mulf %4, %336 : vector<2x256xf32>
    %338 = vector.broadcast %335 : f32 to vector<2x256xf32>
    %339 = arith.mulf %2, %338 : vector<2x256xf32>
    %340 = arith.addf %337, %339 : vector<2x256xf32>
    %c254_i32 = arith.constant 254 : i32
    %341 = tpu.dynamic_rotate %340 by %c254_i32 dim 1 : vector<2x256xf32>, i32 -> vector<2x256xf32>
    %cst_41 = arith.constant 0.000000e+00 : f32
    %342 = vector.broadcast %cst_41 : f32 to vector<2x256xf32>
    %343 = arith.select %27, %341, %342 : vector<2x256xi1>, vector<2x256xf32>
    %344 = arith.addf %333, %343 : vector<2x256xf32>
    %c27 = arith.constant 27 : index
    %345 = memref.load %arg1[%c27] : memref<98xf32, #tpu.memory_space<smem>>
    %c76 = arith.constant 76 : index
    %346 = memref.load %arg1[%c76] : memref<98xf32, #tpu.memory_space<smem>>
    %347 = vector.broadcast %345 : f32 to vector<2x256xf32>
    %348 = arith.mulf %4, %347 : vector<2x256xf32>
    %349 = vector.broadcast %346 : f32 to vector<2x256xf32>
    %350 = arith.mulf %2, %349 : vector<2x256xf32>
    %351 = arith.addf %348, %350 : vector<2x256xf32>
    %c253_i32 = arith.constant 253 : i32
    %352 = tpu.dynamic_rotate %351 by %c253_i32 dim 1 : vector<2x256xf32>, i32 -> vector<2x256xf32>
    %cst_42 = arith.constant 0.000000e+00 : f32
    %353 = vector.broadcast %cst_42 : f32 to vector<2x256xf32>
    %354 = arith.select %31, %352, %353 : vector<2x256xi1>, vector<2x256xf32>
    %355 = arith.addf %344, %354 : vector<2x256xf32>
    %c28 = arith.constant 28 : index
    %356 = memref.load %arg1[%c28] : memref<98xf32, #tpu.memory_space<smem>>
    %c77 = arith.constant 77 : index
    %357 = memref.load %arg1[%c77] : memref<98xf32, #tpu.memory_space<smem>>
    %358 = vector.broadcast %356 : f32 to vector<2x256xf32>
    %359 = arith.mulf %4, %358 : vector<2x256xf32>
    %360 = vector.broadcast %357 : f32 to vector<2x256xf32>
    %361 = arith.mulf %2, %360 : vector<2x256xf32>
    %362 = arith.addf %359, %361 : vector<2x256xf32>
    %c243_i32 = arith.constant 243 : i32
    %363 = tpu.dynamic_rotate %362 by %c243_i32 dim 1 : vector<2x256xf32>, i32 -> vector<2x256xf32>
    %364 = arith.andi %21, %11 : vector<2x256xi1>
    %cst_43 = arith.constant 0.000000e+00 : f32
    %365 = vector.broadcast %cst_43 : f32 to vector<2x256xf32>
    %366 = arith.select %364, %363, %365 : vector<2x256xi1>, vector<2x256xf32>
    %367 = arith.addf %355, %366 : vector<2x256xf32>
    %c29 = arith.constant 29 : index
    %368 = memref.load %arg1[%c29] : memref<98xf32, #tpu.memory_space<smem>>
    %c78 = arith.constant 78 : index
    %369 = memref.load %arg1[%c78] : memref<98xf32, #tpu.memory_space<smem>>
    %370 = vector.broadcast %368 : f32 to vector<2x256xf32>
    %371 = arith.mulf %4, %370 : vector<2x256xf32>
    %372 = vector.broadcast %369 : f32 to vector<2x256xf32>
    %373 = arith.mulf %2, %372 : vector<2x256xf32>
    %374 = arith.addf %371, %373 : vector<2x256xf32>
    %c242_i32 = arith.constant 242 : i32
    %375 = tpu.dynamic_rotate %374 by %c242_i32 dim 1 : vector<2x256xf32>, i32 -> vector<2x256xf32>
    %376 = arith.andi %21, %15 : vector<2x256xi1>
    %cst_44 = arith.constant 0.000000e+00 : f32
    %377 = vector.broadcast %cst_44 : f32 to vector<2x256xf32>
    %378 = arith.select %376, %375, %377 : vector<2x256xi1>, vector<2x256xf32>
    %379 = arith.addf %367, %378 : vector<2x256xf32>
    %c30 = arith.constant 30 : index
    %380 = memref.load %arg1[%c30] : memref<98xf32, #tpu.memory_space<smem>>
    %c79 = arith.constant 79 : index
    %381 = memref.load %arg1[%c79] : memref<98xf32, #tpu.memory_space<smem>>
    %382 = vector.broadcast %380 : f32 to vector<2x256xf32>
    %383 = arith.mulf %4, %382 : vector<2x256xf32>
    %384 = vector.broadcast %381 : f32 to vector<2x256xf32>
    %385 = arith.mulf %2, %384 : vector<2x256xf32>
    %386 = arith.addf %383, %385 : vector<2x256xf32>
    %c241_i32 = arith.constant 241 : i32
    %387 = tpu.dynamic_rotate %386 by %c241_i32 dim 1 : vector<2x256xf32>, i32 -> vector<2x256xf32>
    %388 = arith.andi %21, %19 : vector<2x256xi1>
    %cst_45 = arith.constant 0.000000e+00 : f32
    %389 = vector.broadcast %cst_45 : f32 to vector<2x256xf32>
    %390 = arith.select %388, %387, %389 : vector<2x256xi1>, vector<2x256xf32>
    %391 = arith.addf %379, %390 : vector<2x256xf32>
    %c31 = arith.constant 31 : index
    %392 = memref.load %arg1[%c31] : memref<98xf32, #tpu.memory_space<smem>>
    %c80 = arith.constant 80 : index
    %393 = memref.load %arg1[%c80] : memref<98xf32, #tpu.memory_space<smem>>
    %394 = vector.broadcast %392 : f32 to vector<2x256xf32>
    %395 = arith.mulf %4, %394 : vector<2x256xf32>
    %396 = vector.broadcast %393 : f32 to vector<2x256xf32>
    %397 = arith.mulf %2, %396 : vector<2x256xf32>
    %398 = arith.addf %395, %397 : vector<2x256xf32>
    %c240_i32_46 = arith.constant 240 : i32
    %399 = tpu.dynamic_rotate %398 by %c240_i32_46 dim 1 : vector<2x256xf32>, i32 -> vector<2x256xf32>
    %cst_47 = arith.constant 0.000000e+00 : f32
    %400 = vector.broadcast %cst_47 : f32 to vector<2x256xf32>
    %401 = arith.select %21, %399, %400 : vector<2x256xi1>, vector<2x256xf32>
    %402 = arith.addf %391, %401 : vector<2x256xf32>
    %c32 = arith.constant 32 : index
    %403 = memref.load %arg1[%c32] : memref<98xf32, #tpu.memory_space<smem>>
    %c81 = arith.constant 81 : index
    %404 = memref.load %arg1[%c81] : memref<98xf32, #tpu.memory_space<smem>>
    %405 = vector.broadcast %403 : f32 to vector<2x256xf32>
    %406 = arith.mulf %4, %405 : vector<2x256xf32>
    %407 = vector.broadcast %404 : f32 to vector<2x256xf32>
    %408 = arith.mulf %2, %407 : vector<2x256xf32>
    %409 = arith.addf %406, %408 : vector<2x256xf32>
    %c239_i32 = arith.constant 239 : i32
    %410 = tpu.dynamic_rotate %409 by %c239_i32 dim 1 : vector<2x256xf32>, i32 -> vector<2x256xf32>
    %411 = arith.andi %21, %23 : vector<2x256xi1>
    %cst_48 = arith.constant 0.000000e+00 : f32
    %412 = vector.broadcast %cst_48 : f32 to vector<2x256xf32>
    %413 = arith.select %411, %410, %412 : vector<2x256xi1>, vector<2x256xf32>
    %414 = arith.addf %402, %413 : vector<2x256xf32>
    %c33 = arith.constant 33 : index
    %415 = memref.load %arg1[%c33] : memref<98xf32, #tpu.memory_space<smem>>
    %c82 = arith.constant 82 : index
    %416 = memref.load %arg1[%c82] : memref<98xf32, #tpu.memory_space<smem>>
    %417 = vector.broadcast %415 : f32 to vector<2x256xf32>
    %418 = arith.mulf %4, %417 : vector<2x256xf32>
    %419 = vector.broadcast %416 : f32 to vector<2x256xf32>
    %420 = arith.mulf %2, %419 : vector<2x256xf32>
    %421 = arith.addf %418, %420 : vector<2x256xf32>
    %c238_i32 = arith.constant 238 : i32
    %422 = tpu.dynamic_rotate %421 by %c238_i32 dim 1 : vector<2x256xf32>, i32 -> vector<2x256xf32>
    %423 = arith.andi %21, %27 : vector<2x256xi1>
    %cst_49 = arith.constant 0.000000e+00 : f32
    %424 = vector.broadcast %cst_49 : f32 to vector<2x256xf32>
    %425 = arith.select %423, %422, %424 : vector<2x256xi1>, vector<2x256xf32>
    %426 = arith.addf %414, %425 : vector<2x256xf32>
    %c34 = arith.constant 34 : index
    %427 = memref.load %arg1[%c34] : memref<98xf32, #tpu.memory_space<smem>>
    %c83 = arith.constant 83 : index
    %428 = memref.load %arg1[%c83] : memref<98xf32, #tpu.memory_space<smem>>
    %429 = vector.broadcast %427 : f32 to vector<2x256xf32>
    %430 = arith.mulf %4, %429 : vector<2x256xf32>
    %431 = vector.broadcast %428 : f32 to vector<2x256xf32>
    %432 = arith.mulf %2, %431 : vector<2x256xf32>
    %433 = arith.addf %430, %432 : vector<2x256xf32>
    %c237_i32 = arith.constant 237 : i32
    %434 = tpu.dynamic_rotate %433 by %c237_i32 dim 1 : vector<2x256xf32>, i32 -> vector<2x256xf32>
    %435 = arith.andi %21, %31 : vector<2x256xi1>
    %cst_50 = arith.constant 0.000000e+00 : f32
    %436 = vector.broadcast %cst_50 : f32 to vector<2x256xf32>
    %437 = arith.select %435, %434, %436 : vector<2x256xi1>, vector<2x256xf32>
    %438 = arith.addf %426, %437 : vector<2x256xf32>
    %c35 = arith.constant 35 : index
    %439 = memref.load %arg1[%c35] : memref<98xf32, #tpu.memory_space<smem>>
    %c84 = arith.constant 84 : index
    %440 = memref.load %arg1[%c84] : memref<98xf32, #tpu.memory_space<smem>>
    %441 = vector.broadcast %439 : f32 to vector<2x256xf32>
    %442 = arith.mulf %4, %441 : vector<2x256xf32>
    %443 = vector.broadcast %440 : f32 to vector<2x256xf32>
    %444 = arith.mulf %2, %443 : vector<2x256xf32>
    %445 = arith.addf %442, %444 : vector<2x256xf32>
    %c227_i32 = arith.constant 227 : i32
    %446 = tpu.dynamic_rotate %445 by %c227_i32 dim 1 : vector<2x256xf32>, i32 -> vector<2x256xf32>
    %447 = arith.andi %25, %11 : vector<2x256xi1>
    %cst_51 = arith.constant 0.000000e+00 : f32
    %448 = vector.broadcast %cst_51 : f32 to vector<2x256xf32>
    %449 = arith.select %447, %446, %448 : vector<2x256xi1>, vector<2x256xf32>
    %450 = arith.addf %438, %449 : vector<2x256xf32>
    %c36 = arith.constant 36 : index
    %451 = memref.load %arg1[%c36] : memref<98xf32, #tpu.memory_space<smem>>
    %c85 = arith.constant 85 : index
    %452 = memref.load %arg1[%c85] : memref<98xf32, #tpu.memory_space<smem>>
    %453 = vector.broadcast %451 : f32 to vector<2x256xf32>
    %454 = arith.mulf %4, %453 : vector<2x256xf32>
    %455 = vector.broadcast %452 : f32 to vector<2x256xf32>
    %456 = arith.mulf %2, %455 : vector<2x256xf32>
    %457 = arith.addf %454, %456 : vector<2x256xf32>
    %c226_i32 = arith.constant 226 : i32
    %458 = tpu.dynamic_rotate %457 by %c226_i32 dim 1 : vector<2x256xf32>, i32 -> vector<2x256xf32>
    %459 = arith.andi %25, %15 : vector<2x256xi1>
    %cst_52 = arith.constant 0.000000e+00 : f32
    %460 = vector.broadcast %cst_52 : f32 to vector<2x256xf32>
    %461 = arith.select %459, %458, %460 : vector<2x256xi1>, vector<2x256xf32>
    %462 = arith.addf %450, %461 : vector<2x256xf32>
    %c37 = arith.constant 37 : index
    %463 = memref.load %arg1[%c37] : memref<98xf32, #tpu.memory_space<smem>>
    %c86 = arith.constant 86 : index
    %464 = memref.load %arg1[%c86] : memref<98xf32, #tpu.memory_space<smem>>
    %465 = vector.broadcast %463 : f32 to vector<2x256xf32>
    %466 = arith.mulf %4, %465 : vector<2x256xf32>
    %467 = vector.broadcast %464 : f32 to vector<2x256xf32>
    %468 = arith.mulf %2, %467 : vector<2x256xf32>
    %469 = arith.addf %466, %468 : vector<2x256xf32>
    %c225_i32 = arith.constant 225 : i32
    %470 = tpu.dynamic_rotate %469 by %c225_i32 dim 1 : vector<2x256xf32>, i32 -> vector<2x256xf32>
    %471 = arith.andi %25, %19 : vector<2x256xi1>
    %cst_53 = arith.constant 0.000000e+00 : f32
    %472 = vector.broadcast %cst_53 : f32 to vector<2x256xf32>
    %473 = arith.select %471, %470, %472 : vector<2x256xi1>, vector<2x256xf32>
    %474 = arith.addf %462, %473 : vector<2x256xf32>
    %c38 = arith.constant 38 : index
    %475 = memref.load %arg1[%c38] : memref<98xf32, #tpu.memory_space<smem>>
    %c87 = arith.constant 87 : index
    %476 = memref.load %arg1[%c87] : memref<98xf32, #tpu.memory_space<smem>>
    %477 = vector.broadcast %475 : f32 to vector<2x256xf32>
    %478 = arith.mulf %4, %477 : vector<2x256xf32>
    %479 = vector.broadcast %476 : f32 to vector<2x256xf32>
    %480 = arith.mulf %2, %479 : vector<2x256xf32>
    %481 = arith.addf %478, %480 : vector<2x256xf32>
    %c224_i32_54 = arith.constant 224 : i32
    %482 = tpu.dynamic_rotate %481 by %c224_i32_54 dim 1 : vector<2x256xf32>, i32 -> vector<2x256xf32>
    %cst_55 = arith.constant 0.000000e+00 : f32
    %483 = vector.broadcast %cst_55 : f32 to vector<2x256xf32>
    %484 = arith.select %25, %482, %483 : vector<2x256xi1>, vector<2x256xf32>
    %485 = arith.addf %474, %484 : vector<2x256xf32>
    %c39 = arith.constant 39 : index
    %486 = memref.load %arg1[%c39] : memref<98xf32, #tpu.memory_space<smem>>
    %c88 = arith.constant 88 : index
    %487 = memref.load %arg1[%c88] : memref<98xf32, #tpu.memory_space<smem>>
    %488 = vector.broadcast %486 : f32 to vector<2x256xf32>
    %489 = arith.mulf %4, %488 : vector<2x256xf32>
    %490 = vector.broadcast %487 : f32 to vector<2x256xf32>
    %491 = arith.mulf %2, %490 : vector<2x256xf32>
    %492 = arith.addf %489, %491 : vector<2x256xf32>
    %c223_i32 = arith.constant 223 : i32
    %493 = tpu.dynamic_rotate %492 by %c223_i32 dim 1 : vector<2x256xf32>, i32 -> vector<2x256xf32>
    %494 = arith.andi %25, %23 : vector<2x256xi1>
    %cst_56 = arith.constant 0.000000e+00 : f32
    %495 = vector.broadcast %cst_56 : f32 to vector<2x256xf32>
    %496 = arith.select %494, %493, %495 : vector<2x256xi1>, vector<2x256xf32>
    %497 = arith.addf %485, %496 : vector<2x256xf32>
    %c40 = arith.constant 40 : index
    %498 = memref.load %arg1[%c40] : memref<98xf32, #tpu.memory_space<smem>>
    %c89 = arith.constant 89 : index
    %499 = memref.load %arg1[%c89] : memref<98xf32, #tpu.memory_space<smem>>
    %500 = vector.broadcast %498 : f32 to vector<2x256xf32>
    %501 = arith.mulf %4, %500 : vector<2x256xf32>
    %502 = vector.broadcast %499 : f32 to vector<2x256xf32>
    %503 = arith.mulf %2, %502 : vector<2x256xf32>
    %504 = arith.addf %501, %503 : vector<2x256xf32>
    %c222_i32 = arith.constant 222 : i32
    %505 = tpu.dynamic_rotate %504 by %c222_i32 dim 1 : vector<2x256xf32>, i32 -> vector<2x256xf32>
    %506 = arith.andi %25, %27 : vector<2x256xi1>
    %cst_57 = arith.constant 0.000000e+00 : f32
    %507 = vector.broadcast %cst_57 : f32 to vector<2x256xf32>
    %508 = arith.select %506, %505, %507 : vector<2x256xi1>, vector<2x256xf32>
    %509 = arith.addf %497, %508 : vector<2x256xf32>
    %c41 = arith.constant 41 : index
    %510 = memref.load %arg1[%c41] : memref<98xf32, #tpu.memory_space<smem>>
    %c90 = arith.constant 90 : index
    %511 = memref.load %arg1[%c90] : memref<98xf32, #tpu.memory_space<smem>>
    %512 = vector.broadcast %510 : f32 to vector<2x256xf32>
    %513 = arith.mulf %4, %512 : vector<2x256xf32>
    %514 = vector.broadcast %511 : f32 to vector<2x256xf32>
    %515 = arith.mulf %2, %514 : vector<2x256xf32>
    %516 = arith.addf %513, %515 : vector<2x256xf32>
    %c221_i32 = arith.constant 221 : i32
    %517 = tpu.dynamic_rotate %516 by %c221_i32 dim 1 : vector<2x256xf32>, i32 -> vector<2x256xf32>
    %518 = arith.andi %25, %31 : vector<2x256xi1>
    %cst_58 = arith.constant 0.000000e+00 : f32
    %519 = vector.broadcast %cst_58 : f32 to vector<2x256xf32>
    %520 = arith.select %518, %517, %519 : vector<2x256xi1>, vector<2x256xf32>
    %521 = arith.addf %509, %520 : vector<2x256xf32>
    %c42 = arith.constant 42 : index
    %522 = memref.load %arg1[%c42] : memref<98xf32, #tpu.memory_space<smem>>
    %c91 = arith.constant 91 : index
    %523 = memref.load %arg1[%c91] : memref<98xf32, #tpu.memory_space<smem>>
    %524 = vector.broadcast %522 : f32 to vector<2x256xf32>
    %525 = arith.mulf %4, %524 : vector<2x256xf32>
    %526 = vector.broadcast %523 : f32 to vector<2x256xf32>
    %527 = arith.mulf %2, %526 : vector<2x256xf32>
    %528 = arith.addf %525, %527 : vector<2x256xf32>
    %c211_i32 = arith.constant 211 : i32
    %529 = tpu.dynamic_rotate %528 by %c211_i32 dim 1 : vector<2x256xf32>, i32 -> vector<2x256xf32>
    %530 = arith.andi %29, %11 : vector<2x256xi1>
    %cst_59 = arith.constant 0.000000e+00 : f32
    %531 = vector.broadcast %cst_59 : f32 to vector<2x256xf32>
    %532 = arith.select %530, %529, %531 : vector<2x256xi1>, vector<2x256xf32>
    %533 = arith.addf %521, %532 : vector<2x256xf32>
    %c43 = arith.constant 43 : index
    %534 = memref.load %arg1[%c43] : memref<98xf32, #tpu.memory_space<smem>>
    %c92 = arith.constant 92 : index
    %535 = memref.load %arg1[%c92] : memref<98xf32, #tpu.memory_space<smem>>
    %536 = vector.broadcast %534 : f32 to vector<2x256xf32>
    %537 = arith.mulf %4, %536 : vector<2x256xf32>
    %538 = vector.broadcast %535 : f32 to vector<2x256xf32>
    %539 = arith.mulf %2, %538 : vector<2x256xf32>
    %540 = arith.addf %537, %539 : vector<2x256xf32>
    %c210_i32 = arith.constant 210 : i32
    %541 = tpu.dynamic_rotate %540 by %c210_i32 dim 1 : vector<2x256xf32>, i32 -> vector<2x256xf32>
    %542 = arith.andi %29, %15 : vector<2x256xi1>
    %cst_60 = arith.constant 0.000000e+00 : f32
    %543 = vector.broadcast %cst_60 : f32 to vector<2x256xf32>
    %544 = arith.select %542, %541, %543 : vector<2x256xi1>, vector<2x256xf32>
    %545 = arith.addf %533, %544 : vector<2x256xf32>
    %c44 = arith.constant 44 : index
    %546 = memref.load %arg1[%c44] : memref<98xf32, #tpu.memory_space<smem>>
    %c93 = arith.constant 93 : index
    %547 = memref.load %arg1[%c93] : memref<98xf32, #tpu.memory_space<smem>>
    %548 = vector.broadcast %546 : f32 to vector<2x256xf32>
    %549 = arith.mulf %4, %548 : vector<2x256xf32>
    %550 = vector.broadcast %547 : f32 to vector<2x256xf32>
    %551 = arith.mulf %2, %550 : vector<2x256xf32>
    %552 = arith.addf %549, %551 : vector<2x256xf32>
    %c209_i32 = arith.constant 209 : i32
    %553 = tpu.dynamic_rotate %552 by %c209_i32 dim 1 : vector<2x256xf32>, i32 -> vector<2x256xf32>
    %554 = arith.andi %29, %19 : vector<2x256xi1>
    %cst_61 = arith.constant 0.000000e+00 : f32
    %555 = vector.broadcast %cst_61 : f32 to vector<2x256xf32>
    %556 = arith.select %554, %553, %555 : vector<2x256xi1>, vector<2x256xf32>
    %557 = arith.addf %545, %556 : vector<2x256xf32>
    %c45 = arith.constant 45 : index
    %558 = memref.load %arg1[%c45] : memref<98xf32, #tpu.memory_space<smem>>
    %c94 = arith.constant 94 : index
    %559 = memref.load %arg1[%c94] : memref<98xf32, #tpu.memory_space<smem>>
    %560 = vector.broadcast %558 : f32 to vector<2x256xf32>
    %561 = arith.mulf %4, %560 : vector<2x256xf32>
    %562 = vector.broadcast %559 : f32 to vector<2x256xf32>
    %563 = arith.mulf %2, %562 : vector<2x256xf32>
    %564 = arith.addf %561, %563 : vector<2x256xf32>
    %c208_i32_62 = arith.constant 208 : i32
    %565 = tpu.dynamic_rotate %564 by %c208_i32_62 dim 1 : vector<2x256xf32>, i32 -> vector<2x256xf32>
    %cst_63 = arith.constant 0.000000e+00 : f32
    %566 = vector.broadcast %cst_63 : f32 to vector<2x256xf32>
    %567 = arith.select %29, %565, %566 : vector<2x256xi1>, vector<2x256xf32>
    %568 = arith.addf %557, %567 : vector<2x256xf32>
    %c46 = arith.constant 46 : index
    %569 = memref.load %arg1[%c46] : memref<98xf32, #tpu.memory_space<smem>>
    %c95 = arith.constant 95 : index
    %570 = memref.load %arg1[%c95] : memref<98xf32, #tpu.memory_space<smem>>
    %571 = vector.broadcast %569 : f32 to vector<2x256xf32>
    %572 = arith.mulf %4, %571 : vector<2x256xf32>
    %573 = vector.broadcast %570 : f32 to vector<2x256xf32>
    %574 = arith.mulf %2, %573 : vector<2x256xf32>
    %575 = arith.addf %572, %574 : vector<2x256xf32>
    %c207_i32 = arith.constant 207 : i32
    %576 = tpu.dynamic_rotate %575 by %c207_i32 dim 1 : vector<2x256xf32>, i32 -> vector<2x256xf32>
    %577 = arith.andi %29, %23 : vector<2x256xi1>
    %cst_64 = arith.constant 0.000000e+00 : f32
    %578 = vector.broadcast %cst_64 : f32 to vector<2x256xf32>
    %579 = arith.select %577, %576, %578 : vector<2x256xi1>, vector<2x256xf32>
    %580 = arith.addf %568, %579 : vector<2x256xf32>
    %c47 = arith.constant 47 : index
    %581 = memref.load %arg1[%c47] : memref<98xf32, #tpu.memory_space<smem>>
    %c96 = arith.constant 96 : index
    %582 = memref.load %arg1[%c96] : memref<98xf32, #tpu.memory_space<smem>>
    %583 = vector.broadcast %581 : f32 to vector<2x256xf32>
    %584 = arith.mulf %4, %583 : vector<2x256xf32>
    %585 = vector.broadcast %582 : f32 to vector<2x256xf32>
    %586 = arith.mulf %2, %585 : vector<2x256xf32>
    %587 = arith.addf %584, %586 : vector<2x256xf32>
    %c206_i32 = arith.constant 206 : i32
    %588 = tpu.dynamic_rotate %587 by %c206_i32 dim 1 : vector<2x256xf32>, i32 -> vector<2x256xf32>
    %589 = arith.andi %29, %27 : vector<2x256xi1>
    %cst_65 = arith.constant 0.000000e+00 : f32
    %590 = vector.broadcast %cst_65 : f32 to vector<2x256xf32>
    %591 = arith.select %589, %588, %590 : vector<2x256xi1>, vector<2x256xf32>
    %592 = arith.addf %580, %591 : vector<2x256xf32>
    %c48 = arith.constant 48 : index
    %593 = memref.load %arg1[%c48] : memref<98xf32, #tpu.memory_space<smem>>
    %c97 = arith.constant 97 : index
    %594 = memref.load %arg1[%c97] : memref<98xf32, #tpu.memory_space<smem>>
    %595 = vector.broadcast %593 : f32 to vector<2x256xf32>
    %596 = arith.mulf %4, %595 : vector<2x256xf32>
    %597 = vector.broadcast %594 : f32 to vector<2x256xf32>
    %598 = arith.mulf %2, %597 : vector<2x256xf32>
    %599 = arith.addf %596, %598 : vector<2x256xf32>
    %c205_i32 = arith.constant 205 : i32
    %600 = tpu.dynamic_rotate %599 by %c205_i32 dim 1 : vector<2x256xf32>, i32 -> vector<2x256xf32>
    %601 = arith.andi %29, %31 : vector<2x256xi1>
    %cst_66 = arith.constant 0.000000e+00 : f32
    %602 = vector.broadcast %cst_66 : f32 to vector<2x256xf32>
    %603 = arith.select %601, %600, %602 : vector<2x256xi1>, vector<2x256xf32>
    %604 = arith.addf %592, %603 : vector<2x256xf32>
    %605 = arith.negf %604 : vector<2x256xf32>
    %606 = math.exp %605 : vector<2x256xf32>
    %cst_67 = arith.constant 1.000000e+00 : f32
    %607 = vector.broadcast %cst_67 : f32 to vector<2x256xf32>
    %608 = arith.addf %607, %606 : vector<2x256xf32>
    %609 = arith.divf %607, %608 : vector<2x256xf32>
    %610 = vector.shape_cast %609 : vector<2x256xf32> to vector<2x1x256xf32>
    %c0_68 = arith.constant 0 : index
    %c0_69 = arith.constant 0 : index
    %c0_70 = arith.constant 0 : index
    %611 = vector.load %arg2[%c0_68, %c0_69, %c0_70] : memref<2x4x256xf32, #tpu.memory_space<vmem>>, vector<2x4x256xf32>
    %612 = vector.broadcast %610 : vector<2x1x256xf32> to vector<2x4x256xf32>
    %613 = arith.mulf %611, %612 : vector<2x4x256xf32>
    %c0_71 = arith.constant 0 : index
    %c0_72 = arith.constant 0 : index
    %c0_73 = arith.constant 0 : index
    %614 = vector.load %arg3[%c0_71, %c0_72, %c0_73] : memref<2x4x256xf32, #tpu.memory_space<vmem>>, vector<2x4x256xf32>
    tpu.vector_store %arg3[%c0_71, %c0_72, %c0_73], %613 {strides = array<i32>} : memref<2x4x256xf32, #tpu.memory_space<vmem>>, vector<2x4x256xf32>,
    return
  }
  func.func @transform_0(%arg0: i32) -> i32 {
    %c0_i32 = arith.constant 0 : i32
    %c0_i32_0 = arith.constant 0 : i32
    return %c0_i32 : i32
  }
  func.func @transform_1(%arg0: i32) -> (i32, i32, i32) {
    %c0_i32 = arith.constant 0 : i32
    %c0_i32_0 = arith.constant 0 : i32
    %c0_i32_1 = arith.constant 0 : i32
    return %arg0, %c0_i32, %c0_i32_0 : i32, i32, i32
  }
  func.func @transform_2(%arg0: i32) -> (i32, i32, i32) {
    %c0_i32 = arith.constant 0 : i32
    %c0_i32_0 = arith.constant 0 : i32
    %c0_i32_1 = arith.constant 0 : i32
    return %arg0, %c0_i32, %c0_i32_0 : i32, i32, i32
  }
}

</mosaic_0001>

<llo_original>
// kernel: tpu_custom_call.1
$region0: #{tpu_custom_call.1}
  #allocation0 [shape = 'u32[]', space=smem, size = 0x4, offset = 0x4, fixed_abs, tag = 'smem constant byte address 0x4 - core index']
  #allocation1 [shape = 'u32[144,128]{1,0:T(1,128)}', space=vmem, size = 0x12000, scoped, tag = 'internal scratch']
  %s0 = inlined_call_operand.hbm [shape: f32[98], index: 0, kind: input, shape index: {}]
  %s1 = inlined_call_operand.hbm [shape: f32[2,4,256], index: 1, kind: input, shape index: {}]
  %s2 = inlined_call_operand.hbm [shape: f32[2,4,256], index: 2, kind: output, shape index: {}]
  %s3 = sld [smem:[#allocation0]]
  $region26: #{tpu_custom_call.1} parent=0
    _
  %s5 = ssub.s32 1, %s3
  %s6 = scalar_select 0, %s5, %s3
  $region1: #{tpu_custom_call.1} parent=0
    #allocation2 [shape = 'u8[512]{0}', space=smem, size = 0x200, scoped, tag = 'input window, operand 0, single buffered']
    #allocation3 [shape = 's32[1]{0}', space=sflag, size = 0x4, scoped, tag = 'scoped memory for tpu_custom_call.1']
    #allocation4 [shape = 's32[1]{0}', space=sflag, size = 0x4, scoped, tag = 'scoped memory for tpu_custom_call.1']
    #allocation5 [shape = 's32[1]{0}', space=sflag, size = 0x4, scoped, tag = 'scoped memory for tpu_custom_call.1']
    #allocation6 [shape = 'u8[8192]{0}', space=vmem, size = 0x2000, scoped, tag = 'input window, operand 1, single buffered']
    #allocation7 [shape = 'u8[8192]{0}', space=vmem, size = 0x2000, scoped, tag = 'output window, operand 0, single buffered']
    %7 = vsyncpa [#allocation5], 0
    %8 = vsyncpa [#allocation3], 0
    %9 = vsyncpa [#allocation4], 0
    // Predicated region
    $region2: #{tpu_custom_call.1} parent=1 // pred_check
      _
    $region3: #{tpu_custom_call.1} parent=1 // pred_check_branch
      %11 = sbr.rel (0) target = $region5
    $region4: #{tpu_custom_call.1} parent=1 // pred_region
      %s13 = ssub.s32 16, 16
      %14 = vsyncadd [#allocation5], %s13
      %17 = dma.hbm_to_smem %s0, 16, [#allocation2], [#allocation5]
    $region5: #{tpu_custom_call.1} parent=1 // pred_fallthru
      _
    // Predicated region
    $region6: #{tpu_custom_call.1} parent=1 // pred_check
      _
    $region7: #{tpu_custom_call.1} parent=1 // pred_check_branch
      %19 = sbr.rel (0) target = $region9
    $region8: #{tpu_custom_call.1} parent=1 // pred_region
      %s21 = ssub.s32 256, 256
      %22 = vsyncadd [#allocation3], %s21
      %s23 = sshll.u32 [#allocation6], 4
      %s24 = int_to_ptr.vmem [resolvable:$true] %s23
      %29 = dma.hbm_to_vmem [thread:$0]  %s1, 256, %s24, [#allocation3], 128, 128, 8
    $region9: #{tpu_custom_call.1} parent=1 // pred_fallthru
      _
    // Predicated region
    $region10: #{tpu_custom_call.1} parent=1 // pred_check
      _
    $region11: #{tpu_custom_call.1} parent=1 // pred_check_branch
      %31 = sbr.rel (0) target = $region13
    $region12: #{tpu_custom_call.1} parent=1 // pred_region
      %32 = dma.done [#allocation5], 16
    $region13: #{tpu_custom_call.1} parent=1 // pred_fallthru
      _
    // Predicated region
    $region14: #{tpu_custom_call.1} parent=1 // pred_check
      _
    $region15: #{tpu_custom_call.1} parent=1 // pred_check_branch
      %34 = sbr.rel (0) target = $region17
    $region16: #{tpu_custom_call.1} parent=1 // pred_region
      %35 = dma.done [#allocation3], 256
    $region17: #{tpu_custom_call.1} parent=1 // pred_fallthru
      _
    %36 = sfence
    %v37 = vld [vmem:[#allocation6] sm:$0xff]
    %v38 = vld [vmem:[#allocation6 + $0x8] sm:$0xff]
    %v41 = vcombine.high %v37, %v37
    %v42 = vcombine.high %v38, %v38
    %vm45 = vcmask 1043456
    %v46 = vsel %vm45, %v37, 0.0
    %v47 = vrot.slane %v46, 4
    %v48 = vadd.f32 %v46, %v47
    %v49 = vrot.slane %v48, 2
    %v50 = vadd.f32 %v48, %v49
    %v51 = vrot.slane %v50, 1
    %v52 = vadd.f32 %v50, %v51
    %v53 = vsel %vm45, %v41, 0.0
    %v54 = vrot.slane %v53, 4
    %v55 = vadd.f32 %v53, %v54
    %v56 = vrot.slane %v55, 2
    %v57 = vadd.f32 %v55, %v56
    %v58 = vrot.slane %v57, 1
    %v59 = vadd.f32 %v57, %v58
    %v60 = vsel %vm45, %v38, 0.0
    %v61 = vrot.slane %v60, 4
    %v62 = vadd.f32 %v60, %v61
    %v63 = vrot.slane %v62, 2
    %v64 = vadd.f32 %v62, %v63
    %v65 = vrot.slane %v64, 1
    %v66 = vadd.f32 %v64, %v65
    %v67 = vsel %vm45, %v42, 0.0
    %v68 = vrot.slane %v67, 4
    %v69 = vadd.f32 %v67, %v68
    %v70 = vrot.slane %v69, 2
    %v71 = vadd.f32 %v69, %v70
    %v72 = vrot.slane %v71, 1
    %v73 = vadd.f32 %v71, %v72
    %v74 = vsel %vm45, %v37, -inf
    %v75 = vrot.slane %v74, 4
    %v76 = vmax.f32 %v74, %v75
    %v77 = vrot.slane %v76, 2
    %v78 = vmax.f32 %v76, %v77
    %v79 = vrot.slane %v78, 1
    %v80 = vmax.f32 %v78, %v79
    %v81 = vsel %vm45, %v41, -inf
    %v82 = vrot.slane %v81, 4
    %v83 = vmax.f32 %v81, %v82
    %v84 = vrot.slane %v83, 2
    %v85 = vmax.f32 %v83, %v84
    %v86 = vrot.slane %v85, 1
    %v87 = vmax.f32 %v85, %v86
    %v88 = vsel %vm45, %v38, -inf
    %v89 = vrot.slane %v88, 4
    %v90 = vmax.f32 %v88, %v89
    %v91 = vrot.slane %v90, 2
    %v92 = vmax.f32 %v90, %v91
    %v93 = vrot.slane %v92, 1
    %v94 = vmax.f32 %v92, %v93
    %v95 = vsel %vm45, %v42, -inf
    %v96 = vrot.slane %v95, 4
    %v97 = vmax.f32 %v95, %v96
    %v98 = vrot.slane %v97, 2
    %v99 = vmax.f32 %v97, %v98
    %v100 = vrot.slane %v99, 1
    %v101 = vmax.f32 %v99, %v100
    %v102 = vmul.f32 %v52, 0.25
    %v103 = vmul.f32 %v59, 0.25
    %v104 = vmul.f32 %v66, 0.25
    %v105 = vmul.f32 %v73, 0.25
    %v106 = vlaneseq
    %v107 = vand.u32 %v106, 127
    %v108 = vadd.s32 %v107, 128
    %v109 = vand.u32 %v107, 15
    %v110 = vand.u32 %v108, 15
    %vm111 = vcmp.ge.s32.totalorder %v107, 48
    %vm112 = vcmp.ge.s32.totalorder %v108, 48
    %vm113 = vcmp.ge.s32.totalorder %v109, 3
    %vm114 = vcmp.ge.s32.totalorder %v110, 3
    %vm115 = vcmp.ge.s32.totalorder %v107, 32
    %vm116 = vcmp.ge.s32.totalorder %v108, 32
    %vm117 = vcmp.ge.s32.totalorder %v109, 2
    %vm118 = vcmp.ge.s32.totalorder %v110, 2
    %vm119 = vcmp.ge.s32.totalorder %v107, 16
    %vm120 = vcmp.ge.s32.totalorder %v108, 16
    %vm121 = vcmp.ge.s32.totalorder %v109, 1
    %vm122 = vcmp.ge.s32.totalorder %v110, 1
    %vm123 = vcmp.lt.s32.totalorder %v107, 240
    %vm124 = vcmp.lt.s32.totalorder %v108, 240
    %vm125 = vcmp.lt.s32.totalorder %v109, 15
    %vm126 = vcmp.lt.s32.totalorder %v110, 15
    %vm127 = vcmp.lt.s32.totalorder %v107, 224
    %vm128 = vcmp.lt.s32.totalorder %v108, 224
    %vm129 = vcmp.lt.s32.totalorder %v109, 14
    %vm130 = vcmp.lt.s32.totalorder %v110, 14
    %vm131 = vcmp.lt.s32.totalorder %v107, 208
    %vm132 = vcmp.lt.s32.totalorder %v108, 208
    %vm133 = vcmp.lt.s32.totalorder %v109, 13
    %vm134 = vcmp.lt.s32.totalorder %v110, 13
    %s135 = sld [smem:[#allocation2]]
    %s136 = sld [smem:[#allocation2 + $0x31]]
    %v137 = vstv %s135
    %v138 = vmul.f32 %v102, %v137
    %v139 = vmul.f32 %v103, %v137
    %v140 = vmul.f32 %v104, %v137
    %v141 = vmul.f32 %v105, %v137
    %v142 = vstv %s136
    %v143 = vmul.f32 %v80, %v142
    %v144 = vmul.f32 %v87, %v142
    %v145 = vmul.f32 %v94, %v142
    %v146 = vmul.f32 %v101, %v142
    %v147 = vadd.f32 %v138, %v143
    %v148 = vadd.f32 %v139, %v144
    %v149 = vadd.f32 %v140, %v145
    %v150 = vadd.f32 %v141, %v146
    %vm155 = vcmask 1041409
    %v156 = vsel %vm155, %v149, %v147
    %v157 = vsel %vm155, %v150, %v148
    %160 = vrot.lane.b32.xlu0 %v156, 51
    %v161 = vpop.permute.xlu0 %160
    %162 = vrot.lane.b32.xlu0 %v157, 51
    %v163 = vpop.permute.xlu0 %162
    %vm164 = vcmp.lt.s32.totalorder %v107, 51
    %v165 = vsel %vm164, %v161, %v163
    %v166 = vsel %vm164, %v163, %v161
    %vm167 = vmand %vm111, %vm113
    %vm168 = vmand %vm112, %vm114
    %v169 = vsel %vm167, %v166, 0.0
    %v170 = vsel %vm168, %v165, 0.0
    %v171 = vadd.f32 %v169, 0.0
    %v172 = vadd.f32 %v170, 0.0
    %s173 = sld [smem:[#allocation2 + $0x1]]
    %s174 = sld [smem:[#allocation2 + $0x32]]
    %v175 = vstv %s173
    %v176 = vmul.f32 %v102, %v175
    %v177 = vmul.f32 %v103, %v175
    %v178 = vmul.f32 %v104, %v175
    %v179 = vmul.f32 %v105, %v175
    %v180 = vstv %s174
    %v181 = vmul.f32 %v80, %v180
    %v182 = vmul.f32 %v87, %v180
    %v183 = vmul.f32 %v94, %v180
    %v184 = vmul.f32 %v101, %v180
    %v185 = vadd.f32 %v176, %v181
    %v186 = vadd.f32 %v177, %v182
    %v187 = vadd.f32 %v178, %v183
    %v188 = vadd.f32 %v179, %v184
    %v193 = vsel %vm155, %v187, %v185
    %v194 = vsel %vm155, %v188, %v186
    %197 = vrot.lane.b32.xlu0 %v193, 50
    %v198 = vpop.permute.xlu0 %197
    %199 = vrot.lane.b32.xlu0 %v194, 50
    %v200 = vpop.permute.xlu0 %199
    %vm201 = vcmp.lt.s32.totalorder %v107, 50
    %v202 = vsel %vm201, %v198, %v200
    %v203 = vsel %vm201, %v200, %v198
    %vm204 = vmand %vm111, %vm117
    %vm205 = vmand %vm112, %vm118
    %v206 = vsel %vm204, %v203, 0.0
    %v207 = vsel %vm205, %v202, 0.0
    %v208 = vadd.f32 %v171, %v206
    %v209 = vadd.f32 %v172, %v207
    %s210 = sld [smem:[#allocation2 + $0x2]]
    %s211 = sld [smem:[#allocation2 + $0x33]]
    %v212 = vstv %s210
    %v213 = vmul.f32 %v102, %v212
    %v214 = vmul.f32 %v103, %v212
    %v215 = vmul.f32 %v104, %v212
    %v216 = vmul.f32 %v105, %v212
    %v217 = vstv %s211
    %v218 = vmul.f32 %v80, %v217
    %v219 = vmul.f32 %v87, %v217
    %v220 = vmul.f32 %v94, %v217
    %v221 = vmul.f32 %v101, %v217
    %v222 = vadd.f32 %v213, %v218
    %v223 = vadd.f32 %v214, %v219
    %v224 = vadd.f32 %v215, %v220
    %v225 = vadd.f32 %v216, %v221
    %v230 = vsel %vm155, %v224, %v222
    %v231 = vsel %vm155, %v225, %v223
    %234 = vrot.lane.b32.xlu0 %v230, 49
    %v235 = vpop.permute.xlu0 %234
    %236 = vrot.lane.b32.xlu0 %v231, 49
    %v237 = vpop.permute.xlu0 %236
    %vm238 = vcmp.lt.s32.totalorder %v107, 49
    %v239 = vsel %vm238, %v235, %v237
    %v240 = vsel %vm238, %v237, %v235
    %vm241 = vmand %vm111, %vm121
    %vm242 = vmand %vm112, %vm122
    %v243 = vsel %vm241, %v240, 0.0
    %v244 = vsel %vm242, %v239, 0.0
    %v245 = vadd.f32 %v208, %v243
    %v246 = vadd.f32 %v209, %v244
    %s247 = sld [smem:[#allocation2 + $0x3]]
    %s248 = sld [smem:[#allocation2 + $0x34]]
    %v249 = vstv %s247
    %v250 = vmul.f32 %v102, %v249
    %v251 = vmul.f32 %v103, %v249
    %v252 = vmul.f32 %v104, %v249
    %v253 = vmul.f32 %v105, %v249
    %v254 = vstv %s248
    %v255 = vmul.f32 %v80, %v254
    %v256 = vmul.f32 %v87, %v254
    %v257 = vmul.f32 %v94, %v254
    %v258 = vmul.f32 %v101, %v254
    %v259 = vadd.f32 %v250, %v255
    %v260 = vadd.f32 %v251, %v256
    %v261 = vadd.f32 %v252, %v257
    %v262 = vadd.f32 %v253, %v258
    %v267 = vsel %vm155, %v261, %v259
    %v268 = vsel %vm155, %v262, %v260
    %271 = vrot.lane.b32.xlu0 %v267, 48
    %v272 = vpop.permute.xlu0 %271
    %273 = vrot.lane.b32.xlu0 %v268, 48
    %v274 = vpop.permute.xlu0 %273
    %vm275 = vcmp.lt.s32.totalorder %v107, 48
    %v276 = vsel %vm275, %v272, %v274
    %v277 = vsel %vm275, %v274, %v272
    %v278 = vsel %vm111, %v277, 0.0
    %v279 = vsel %vm112, %v276, 0.0
    %v280 = vadd.f32 %v245, %v278
    %v281 = vadd.f32 %v246, %v279
    %s282 = sld [smem:[#allocation2 + $0x4]]
    %s283 = sld [smem:[#allocation2 + $0x35]]
    %v284 = vstv %s282
    %v285 = vmul.f32 %v102, %v284
    %v286 = vmul.f32 %v103, %v284
    %v287 = vmul.f32 %v104, %v284
    %v288 = vmul.f32 %v105, %v284
    %v289 = vstv %s283
    %v290 = vmul.f32 %v80, %v289
    %v291 = vmul.f32 %v87, %v289
    %v292 = vmul.f32 %v94, %v289
    %v293 = vmul.f32 %v101, %v289
    %v294 = vadd.f32 %v285, %v290
    %v295 = vadd.f32 %v286, %v291
    %v296 = vadd.f32 %v287, %v292
    %v297 = vadd.f32 %v288, %v293
    %v302 = vsel %vm155, %v296, %v294
    %v303 = vsel %vm155, %v297, %v295
    %306 = vrot.lane.b32.xlu0 %v302, 47
    %v307 = vpop.permute.xlu0 %306
    %308 = vrot.lane.b32.xlu0 %v303, 47
    %v309 = vpop.permute.xlu0 %308
    %vm310 = vcmp.lt.s32.totalorder %v107, 47
    %v311 = vsel %vm310, %v307, %v309
    %v312 = vsel %vm310, %v309, %v307
    %vm313 = vmand %vm111, %vm125
    %vm314 = vmand %vm112, %vm126
    %v315 = vsel %vm313, %v312, 0.0
    %v316 = vsel %vm314, %v311, 0.0
    %v317 = vadd.f32 %v280, %v315
    %v318 = vadd.f32 %v281, %v316
    %s319 = sld [smem:[#allocation2 + $0x5]]
    %s320 = sld [smem:[#allocation2 + $0x36]]
    %v321 = vstv %s319
    %v322 = vmul.f32 %v102, %v321
    %v323 = vmul.f32 %v103, %v321
    %v324 = vmul.f32 %v104, %v321
    %v325 = vmul.f32 %v105, %v321
    %v326 = vstv %s320
    %v327 = vmul.f32 %v80, %v326
    %v328 = vmul.f32 %v87, %v326
    %v329 = vmul.f32 %v94, %v326
    %v330 = vmul.f32 %v101, %v326
    %v331 = vadd.f32 %v322, %v327
    %v332 = vadd.f32 %v323, %v328
    %v333 = vadd.f32 %v324, %v329
    %v334 = vadd.f32 %v325, %v330
    %v339 = vsel %vm155, %v333, %v331
    %v340 = vsel %vm155, %v334, %v332
    %343 = vrot.lane.b32.xlu0 %v339, 46
    %v344 = vpop.permute.xlu0 %343
    %345 = vrot.lane.b32.xlu0 %v340, 46
    %v346 = vpop.permute.xlu0 %345
    %vm347 = vcmp.lt.s32.totalorder %v107, 46
    %v348 = vsel %vm347, %v344, %v346
    %v349 = vsel %vm347, %v346, %v344
    %vm350 = vmand %vm111, %vm129
    %vm351 = vmand %vm112, %vm130
    %v352 = vsel %vm350, %v349, 0.0
    %v353 = vsel %vm351, %v348, 0.0
    %v354 = vadd.f32 %v317, %v352
    %v355 = vadd.f32 %v318, %v353
    %s356 = sld [smem:[#allocation2 + $0x6]]
    %s357 = sld [smem:[#allocation2 + $0x37]]
    %v358 = vstv %s356
    %v359 = vmul.f32 %v102, %v358
    %v360 = vmul.f32 %v103, %v358
    %v361 = vmul.f32 %v104, %v358
    %v362 = vmul.f32 %v105, %v358
    %v363 = vstv %s357
    %v364 = vmul.f32 %v80, %v363
    %v365 = vmul.f32 %v87, %v363
    %v366 = vmul.f32 %v94, %v363
    %v367 = vmul.f32 %v101, %v363
    %v368 = vadd.f32 %v359, %v364
    %v369 = vadd.f32 %v360, %v365
    %v370 = vadd.f32 %v361, %v366
    %v371 = vadd.f32 %v362, %v367
    %v376 = vsel %vm155, %v370, %v368
    %v377 = vsel %vm155, %v371, %v369
    %380 = vrot.lane.b32.xlu0 %v376, 45
    %v381 = vpop.permute.xlu0 %380
    %382 = vrot.lane.b32.xlu0 %v377, 45
    %v383 = vpop.permute.xlu0 %382
    %vm384 = vcmp.lt.s32.totalorder %v107, 45
    %v385 = vsel %vm384, %v381, %v383
    %v386 = vsel %vm384, %v383, %v381
    %vm387 = vmand %vm111, %vm133
    %vm388 = vmand %vm112, %vm134
    %v389 = vsel %vm387, %v386, 0.0
    %v390 = vsel %vm388, %v385, 0.0
    %v391 = vadd.f32 %v354, %v389
    %v392 = vadd.f32 %v355, %v390
    %s393 = sld [smem:[#allocation2 + $0x7]]
    %s394 = sld [smem:[#allocation2 + $0x38]]
    %v395 = vstv %s393
    %v396 = vmul.f32 %v102, %v395
    %v397 = vmul.f32 %v103, %v395
    %v398 = vmul.f32 %v104, %v395
    %v399 = vmul.f32 %v105, %v395
    %v400 = vstv %s394
    %v401 = vmul.f32 %v80, %v400
    %v402 = vmul.f32 %v87, %v400
    %v403 = vmul.f32 %v94, %v400
    %v404 = vmul.f32 %v101, %v400
    %v405 = vadd.f32 %v396, %v401
    %v406 = vadd.f32 %v397, %v402
    %v407 = vadd.f32 %v398, %v403
    %v408 = vadd.f32 %v399, %v404
    %v413 = vsel %vm155, %v407, %v405
    %v414 = vsel %vm155, %v408, %v406
    %417 = vrot.lane.b32.xlu0 %v413, 35
    %v418 = vpop.permute.xlu0 %417
    %419 = vrot.lane.b32.xlu0 %v414, 35
    %v420 = vpop.permute.xlu0 %419
    %vm421 = vcmp.lt.s32.totalorder %v107, 35
    %v422 = vsel %vm421, %v418, %v420
    %v423 = vsel %vm421, %v420, %v418
    %vm424 = vmand %vm115, %vm113
    %vm425 = vmand %vm116, %vm114
    %v426 = vsel %vm424, %v423, 0.0
    %v427 = vsel %vm425, %v422, 0.0
    %v428 = vadd.f32 %v391, %v426
    %v429 = vadd.f32 %v392, %v427
    %s430 = sld [smem:[#allocation2 + $0x8]]
    %s431 = sld [smem:[#allocation2 + $0x39]]
    %v432 = vstv %s430
    %v433 = vmul.f32 %v102, %v432
    %v434 = vmul.f32 %v103, %v432
    %v435 = vmul.f32 %v104, %v432
    %v436 = vmul.f32 %v105, %v432
    %v437 = vstv %s431
    %v438 = vmul.f32 %v80, %v437
    %v439 = vmul.f32 %v87, %v437
    %v440 = vmul.f32 %v94, %v437
    %v441 = vmul.f32 %v101, %v437
    %v442 = vadd.f32 %v433, %v438
    %v443 = vadd.f32 %v434, %v439
    %v444 = vadd.f32 %v435, %v440
    %v445 = vadd.f32 %v436, %v441
    %v450 = vsel %vm155, %v444, %v442
    %v451 = vsel %vm155, %v445, %v443
    %454 = vrot.lane.b32.xlu0 %v450, 34
    %v455 = vpop.permute.xlu0 %454
    %456 = vrot.lane.b32.xlu0 %v451, 34
    %v457 = vpop.permute.xlu0 %456
    %vm458 = vcmp.lt.s32.totalorder %v107, 34
    %v459 = vsel %vm458, %v455, %v457
    %v460 = vsel %vm458, %v457, %v455
    %vm461 = vmand %vm115, %vm117
    %vm462 = vmand %vm116, %vm118
    %v463 = vsel %vm461, %v460, 0.0
    %v464 = vsel %vm462, %v459, 0.0
    %v465 = vadd.f32 %v428, %v463
    %v466 = vadd.f32 %v429, %v464
    %s467 = sld [smem:[#allocation2 + $0x9]]
    %s468 = sld [smem:[#allocation2 + $0x3a]]
    %v469 = vstv %s467
    %v470 = vmul.f32 %v102, %v469
    %v471 = vmul.f32 %v103, %v469
    %v472 = vmul.f32 %v104, %v469
    %v473 = vmul.f32 %v105, %v469
    %v474 = vstv %s468
    %v475 = vmul.f32 %v80, %v474
    %v476 = vmul.f32 %v87, %v474
    %v477 = vmul.f32 %v94, %v474
    %v478 = vmul.f32 %v101, %v474
    %v479 = vadd.f32 %v470, %v475
    %v480 = vadd.f32 %v471, %v476
    %v481 = vadd.f32 %v472, %v477
    %v482 = vadd.f32 %v473, %v478
    %v487 = vsel %vm155, %v481, %v479
    %v488 = vsel %vm155, %v482, %v480
    %491 = vrot.lane.b32.xlu0 %v487, 33
    %v492 = vpop.permute.xlu0 %491
    %493 = vrot.lane.b32.xlu0 %v488, 33
    %v494 = vpop.permute.xlu0 %493
    %vm495 = vcmp.lt.s32.totalorder %v107, 33
    %v496 = vsel %vm495, %v492, %v494
    %v497 = vsel %vm495, %v494, %v492
    %vm498 = vmand %vm115, %vm121
    %vm499 = vmand %vm116, %vm122
    %v500 = vsel %vm498, %v497, 0.0
    %v501 = vsel %vm499, %v496, 0.0
    %v502 = vadd.f32 %v465, %v500
    %v503 = vadd.f32 %v466, %v501
    %s504 = sld [smem:[#allocation2 + $0xa]]
    %s505 = sld [smem:[#allocation2 + $0x3b]]
    %v506 = vstv %s504
    %v507 = vmul.f32 %v102, %v506
    %v508 = vmul.f32 %v103, %v506
    %v509 = vmul.f32 %v104, %v506
    %v510 = vmul.f32 %v105, %v506
    %v511 = vstv %s505
    %v512 = vmul.f32 %v80, %v511
    %v513 = vmul.f32 %v87, %v511
    %v514 = vmul.f32 %v94, %v511
    %v515 = vmul.f32 %v101, %v511
    %v516 = vadd.f32 %v507, %v512
    %v517 = vadd.f32 %v508, %v513
    %v518 = vadd.f32 %v509, %v514
    %v519 = vadd.f32 %v510, %v515
    %v524 = vsel %vm155, %v518, %v516
    %v525 = vsel %vm155, %v519, %v517
    %528 = vrot.lane.b32.xlu0 %v524, 32
    %v529 = vpop.permute.xlu0 %528
    %530 = vrot.lane.b32.xlu0 %v525, 32
    %v531 = vpop.permute.xlu0 %530
    %vm532 = vcmp.lt.s32.totalorder %v107, 32
    %v533 = vsel %vm532, %v529, %v531
    %v534 = vsel %vm532, %v531, %v529
    %v535 = vsel %vm115, %v534, 0.0
    %v536 = vsel %vm116, %v533, 0.0
    %v537 = vadd.f32 %v502, %v535
    %v538 = vadd.f32 %v503, %v536
    %s539 = sld [smem:[#allocation2 + $0xb]]
    %s540 = sld [smem:[#allocation2 + $0x3c]]
    %v541 = vstv %s539
    %v542 = vmul.f32 %v102, %v541
    %v543 = vmul.f32 %v103, %v541
    %v544 = vmul.f32 %v104, %v541
    %v545 = vmul.f32 %v105, %v541
    %v546 = vstv %s540
    %v547 = vmul.f32 %v80, %v546
    %v548 = vmul.f32 %v87, %v546
    %v549 = vmul.f32 %v94, %v546
    %v550 = vmul.f32 %v101, %v546
    %v551 = vadd.f32 %v542, %v547
    %v552 = vadd.f32 %v543, %v548
    %v553 = vadd.f32 %v544, %v549
    %v554 = vadd.f32 %v545, %v550
    %v559 = vsel %vm155, %v553, %v551
    %v560 = vsel %vm155, %v554, %v552
    %563 = vrot.lane.b32.xlu0 %v559, 31
    %v564 = vpop.permute.xlu0 %563
    %565 = vrot.lane.b32.xlu0 %v560, 31
    %v566 = vpop.permute.xlu0 %565
    %vm567 = vcmp.lt.s32.totalorder %v107, 31
    %v568 = vsel %vm567, %v564, %v566
    %v569 = vsel %vm567, %v566, %v564
    %vm570 = vmand %vm115, %vm125
    %vm571 = vmand %vm116, %vm126
    %v572 = vsel %vm570, %v569, 0.0
    %v573 = vsel %vm571, %v568, 0.0
    %v574 = vadd.f32 %v537, %v572
    %v575 = vadd.f32 %v538, %v573
    %s576 = sld [smem:[#allocation2 + $0xc]]
    %s577 = sld [smem:[#allocation2 + $0x3d]]
    %v578 = vstv %s576
    %v579 = vmul.f32 %v102, %v578
    %v580 = vmul.f32 %v103, %v578
    %v581 = vmul.f32 %v104, %v578
    %v582 = vmul.f32 %v105, %v578
    %v583 = vstv %s577
    %v584 = vmul.f32 %v80, %v583
    %v585 = vmul.f32 %v87, %v583
    %v586 = vmul.f32 %v94, %v583
    %v587 = vmul.f32 %v101, %v583
    %v588 = vadd.f32 %v579, %v584
    %v589 = vadd.f32 %v580, %v585
    %v590 = vadd.f32 %v581, %v586
    %v591 = vadd.f32 %v582, %v587
    %v596 = vsel %vm155, %v590, %v588
    %v597 = vsel %vm155, %v591, %v589
    %600 = vrot.lane.b32.xlu0 %v596, 30
    %v601 = vpop.permute.xlu0 %600
    %602 = vrot.lane.b32.xlu0 %v597, 30
    %v603 = vpop.permute.xlu0 %602
    %vm604 = vcmp.lt.s32.totalorder %v107, 30
    %v605 = vsel %vm604, %v601, %v603
    %v606 = vsel %vm604, %v603, %v601
    %vm607 = vmand %vm115, %vm129
    %vm608 = vmand %vm116, %vm130
    %v609 = vsel %vm607, %v606, 0.0
    %v610 = vsel %vm608, %v605, 0.0
    %v611 = vadd.f32 %v574, %v609
    %v612 = vadd.f32 %v575, %v610
    %s613 = sld [smem:[#allocation2 + $0xd]]
    %s614 = sld [smem:[#allocation2 + $0x3e]]
    %v615 = vstv %s613
    %v616 = vmul.f32 %v102, %v615
    %v617 = vmul.f32 %v103, %v615
    %v618 = vmul.f32 %v104, %v615
    %v619 = vmul.f32 %v105, %v615
    %v620 = vstv %s614
    %v621 = vmul.f32 %v80, %v620
    %v622 = vmul.f32 %v87, %v620
    %v623 = vmul.f32 %v94, %v620
    %v624 = vmul.f32 %v101, %v620
    %v625 = vadd.f32 %v616, %v621
    %v626 = vadd.f32 %v617, %v622
    %v627 = vadd.f32 %v618, %v623
    %v628 = vadd.f32 %v619, %v624
    %v633 = vsel %vm155, %v627, %v625
    %v634 = vsel %vm155, %v628, %v626
    %637 = vrot.lane.b32.xlu0 %v633, 29
    %v638 = vpop.permute.xlu0 %637
    %639 = vrot.lane.b32.xlu0 %v634, 29
    %v640 = vpop.permute.xlu0 %639
    %vm641 = vcmp.lt.s32.totalorder %v107, 29
    %v642 = vsel %vm641, %v638, %v640
    %v643 = vsel %vm641, %v640, %v638
    %vm644 = vmand %vm115, %vm133
    %vm645 = vmand %vm116, %vm134
    %v646 = vsel %vm644, %v643, 0.0
    %v647 = vsel %vm645, %v642, 0.0
    %v648 = vadd.f32 %v611, %v646
    %v649 = vadd.f32 %v612, %v647
    %s650 = sld [smem:[#allocation2 + $0xe]]
    %s651 = sld [smem:[#allocation2 + $0x3f]]
    %v652 = vstv %s650
    %v653 = vmul.f32 %v102, %v652
    %v654 = vmul.f32 %v103, %v652
    %v655 = vmul.f32 %v104, %v652
    %v656 = vmul.f32 %v105, %v652
    %v657 = vstv %s651
    %v658 = vmul.f32 %v80, %v657
    %v659 = vmul.f32 %v87, %v657
    %v660 = vmul.f32 %v94, %v657
    %v661 = vmul.f32 %v101, %v657
    %v662 = vadd.f32 %v653, %v658
    %v663 = vadd.f32 %v654, %v659
    %v664 = vadd.f32 %v655, %v660
    %v665 = vadd.f32 %v656, %v661
    %v670 = vsel %vm155, %v664, %v662
    %v671 = vsel %vm155, %v665, %v663
    %674 = vrot.lane.b32.xlu0 %v670, 19
    %v675 = vpop.permute.xlu0 %674
    %676 = vrot.lane.b32.xlu0 %v671, 19
    %v677 = vpop.permute.xlu0 %676
    %vm678 = vcmp.lt.s32.totalorder %v107, 19
    %v679 = vsel %vm678, %v675, %v677
    %v680 = vsel %vm678, %v677, %v675
    %vm681 = vmand %vm119, %vm113
    %vm682 = vmand %vm120, %vm114
    %v683 = vsel %vm681, %v680, 0.0
    %v684 = vsel %vm682, %v679, 0.0
    %v685 = vadd.f32 %v648, %v683
    %v686 = vadd.f32 %v649, %v684
    %s687 = sld [smem:[#allocation2 + $0xf]]
    %s688 = sld [smem:[#allocation2 + $0x40]]
    %v689 = vstv %s687
    %v690 = vmul.f32 %v102, %v689
    %v691 = vmul.f32 %v103, %v689
    %v692 = vmul.f32 %v104, %v689
    %v693 = vmul.f32 %v105, %v689
    %v694 = vstv %s688
    %v695 = vmul.f32 %v80, %v694
    %v696 = vmul.f32 %v87, %v694
    %v697 = vmul.f32 %v94, %v694
    %v698 = vmul.f32 %v101, %v694
    %v699 = vadd.f32 %v690, %v695
    %v700 = vadd.f32 %v691, %v696
    %v701 = vadd.f32 %v692, %v697
    %v702 = vadd.f32 %v693, %v698
    %v707 = vsel %vm155, %v701, %v699
    %v708 = vsel %vm155, %v702, %v700
    %711 = vrot.lane.b32.xlu0 %v707, 18
    %v712 = vpop.permute.xlu0 %711
    %713 = vrot.lane.b32.xlu0 %v708, 18
    %v714 = vpop.permute.xlu0 %713
    %vm715 = vcmp.lt.s32.totalorder %v107, 18
    %v716 = vsel %vm715, %v712, %v714
    %v717 = vsel %vm715, %v714, %v712
    %vm718 = vmand %vm119, %vm117
    %vm719 = vmand %vm120, %vm118
    %v720 = vsel %vm718, %v717, 0.0
    %v721 = vsel %vm719, %v716, 0.0
    %v722 = vadd.f32 %v685, %v720
    %v723 = vadd.f32 %v686, %v721
    %s724 = sld [smem:[#allocation2 + $0x10]]
    %s725 = sld [smem:[#allocation2 + $0x41]]
    %v726 = vstv %s724
    %v727 = vmul.f32 %v102, %v726
    %v728 = vmul.f32 %v103, %v726
    %v729 = vmul.f32 %v104, %v726
    %v730 = vmul.f32 %v105, %v726
    %v731 = vstv %s725
    %v732 = vmul.f32 %v80, %v731
    %v733 = vmul.f32 %v87, %v731
    %v734 = vmul.f32 %v94, %v731
    %v735 = vmul.f32 %v101, %v731
    %v736 = vadd.f32 %v727, %v732
    %v737 = vadd.f32 %v728, %v733
    %v738 = vadd.f32 %v729, %v734
    %v739 = vadd.f32 %v730, %v735
    %v744 = vsel %vm155, %v738, %v736
    %v745 = vsel %vm155, %v739, %v737
    %748 = vrot.lane.b32.xlu0 %v744, 17
    %v749 = vpop.permute.xlu0 %748
    %750 = vrot.lane.b32.xlu0 %v745, 17
    %v751 = vpop.permute.xlu0 %750
    %vm752 = vcmp.lt.s32.totalorder %v107, 17
    %v753 = vsel %vm752, %v749, %v751
    %v754 = vsel %vm752, %v751, %v749
    %vm755 = vmand %vm119, %vm121
    %vm756 = vmand %vm120, %vm122
    %v757 = vsel %vm755, %v754, 0.0
    %v758 = vsel %vm756, %v753, 0.0
    %v759 = vadd.f32 %v722, %v757
    %v760 = vadd.f32 %v723, %v758
    %s761 = sld [smem:[#allocation2 + $0x11]]
    %s762 = sld [smem:[#allocation2 + $0x42]]
    %v763 = vstv %s761
    %v764 = vmul.f32 %v102, %v763
    %v765 = vmul.f32 %v103, %v763
    %v766 = vmul.f32 %v104, %v763
    %v767 = vmul.f32 %v105, %v763
    %v768 = vstv %s762
    %v769 = vmul.f32 %v80, %v768
    %v770 = vmul.f32 %v87, %v768
    %v771 = vmul.f32 %v94, %v768
    %v772 = vmul.f32 %v101, %v768
    %v773 = vadd.f32 %v764, %v769
    %v774 = vadd.f32 %v765, %v770
    %v775 = vadd.f32 %v766, %v771
    %v776 = vadd.f32 %v767, %v772
    %v781 = vsel %vm155, %v775, %v773
    %v782 = vsel %vm155, %v776, %v774
    %785 = vrot.lane.b32.xlu0 %v781, 16
    %v786 = vpop.permute.xlu0 %785
    %787 = vrot.lane.b32.xlu0 %v782, 16
    %v788 = vpop.permute.xlu0 %787
    %vm789 = vcmp.lt.s32.totalorder %v107, 16
    %v790 = vsel %vm789, %v786, %v788
    %v791 = vsel %vm789, %v788, %v786
    %v792 = vsel %vm119, %v791, 0.0
    %v793 = vsel %vm120, %v790, 0.0
    %v794 = vadd.f32 %v759, %v792
    %v795 = vadd.f32 %v760, %v793
    %s796 = sld [smem:[#allocation2 + $0x12]]
    %s797 = sld [smem:[#allocation2 + $0x43]]
    %v798 = vstv %s796
    %v799 = vmul.f32 %v102, %v798
    %v800 = vmul.f32 %v103, %v798
    %v801 = vmul.f32 %v104, %v798
    %v802 = vmul.f32 %v105, %v798
    %v803 = vstv %s797
    %v804 = vmul.f32 %v80, %v803
    %v805 = vmul.f32 %v87, %v803
    %v806 = vmul.f32 %v94, %v803
    %v807 = vmul.f32 %v101, %v803
    %v808 = vadd.f32 %v799, %v804
    %v809 = vadd.f32 %v800, %v805
    %v810 = vadd.f32 %v801, %v806
    %v811 = vadd.f32 %v802, %v807
    %v816 = vsel %vm155, %v810, %v808
    %v817 = vsel %vm155, %v811, %v809
    %820 = vrot.lane.b32.xlu0 %v816, 15
    %v821 = vpop.permute.xlu0 %820
    %822 = vrot.lane.b32.xlu0 %v817, 15
    %v823 = vpop.permute.xlu0 %822
    %vm824 = vcmp.lt.s32.totalorder %v107, 15
    %v825 = vsel %vm824, %v821, %v823
    %v826 = vsel %vm824, %v823, %v821
    %vm827 = vmand %vm119, %vm125
    %vm828 = vmand %vm120, %vm126
    %v829 = vsel %vm827, %v826, 0.0
    %v830 = vsel %vm828, %v825, 0.0
    %v831 = vadd.f32 %v794, %v829
    %v832 = vadd.f32 %v795, %v830
    %s833 = sld [smem:[#allocation2 + $0x13]]
    %s834 = sld [smem:[#allocation2 + $0x44]]
    %v835 = vstv %s833
    %v836 = vmul.f32 %v102, %v835
    %v837 = vmul.f32 %v103, %v835
    %v838 = vmul.f32 %v104, %v835
    %v839 = vmul.f32 %v105, %v835
    %v840 = vstv %s834
    %v841 = vmul.f32 %v80, %v840
    %v842 = vmul.f32 %v87, %v840
    %v843 = vmul.f32 %v94, %v840
    %v844 = vmul.f32 %v101, %v840
    %v845 = vadd.f32 %v836, %v841
    %v846 = vadd.f32 %v837, %v842
    %v847 = vadd.f32 %v838, %v843
    %v848 = vadd.f32 %v839, %v844
    %v853 = vsel %vm155, %v847, %v845
    %v854 = vsel %vm155, %v848, %v846
    %857 = vrot.lane.b32.xlu0 %v853, 14
    %v858 = vpop.permute.xlu0 %857
    %859 = vrot.lane.b32.xlu0 %v854, 14
    %v860 = vpop.permute.xlu0 %859
    %vm861 = vcmp.lt.s32.totalorder %v107, 14
    %v862 = vsel %vm861, %v858, %v860
    %v863 = vsel %vm861, %v860, %v858
    %vm864 = vmand %vm119, %vm129
    %vm865 = vmand %vm120, %vm130
    %v866 = vsel %vm864, %v863, 0.0
    %v867 = vsel %vm865, %v862, 0.0
    %v868 = vadd.f32 %v831, %v866
    %v869 = vadd.f32 %v832, %v867
    %s870 = sld [smem:[#allocation2 + $0x14]]
    %s871 = sld [smem:[#allocation2 + $0x45]]
    %v872 = vstv %s870
    %v873 = vmul.f32 %v102, %v872
    %v874 = vmul.f32 %v103, %v872
    %v875 = vmul.f32 %v104, %v872
    %v876 = vmul.f32 %v105, %v872
    %v877 = vstv %s871
    %v878 = vmul.f32 %v80, %v877
    %v879 = vmul.f32 %v87, %v877
    %v880 = vmul.f32 %v94, %v877
    %v881 = vmul.f32 %v101, %v877
    %v882 = vadd.f32 %v873, %v878
    %v883 = vadd.f32 %v874, %v879
    %v884 = vadd.f32 %v875, %v880
    %v885 = vadd.f32 %v876, %v881
    %v890 = vsel %vm155, %v884, %v882
    %v891 = vsel %vm155, %v885, %v883
    %894 = vrot.lane.b32.xlu0 %v890, 13
    %v895 = vpop.permute.xlu0 %894
    %896 = vrot.lane.b32.xlu0 %v891, 13
    %v897 = vpop.permute.xlu0 %896
    %vm898 = vcmp.lt.s32.totalorder %v107, 13
    %v899 = vsel %vm898, %v895, %v897
    %v900 = vsel %vm898, %v897, %v895
    %vm901 = vmand %vm119, %vm133
    %vm902 = vmand %vm120, %vm134
    %v903 = vsel %vm901, %v900, 0.0
    %v904 = vsel %vm902, %v899, 0.0
    %v905 = vadd.f32 %v868, %v903
    %v906 = vadd.f32 %v869, %v904
    %s907 = sld [smem:[#allocation2 + $0x15]]
    %s908 = sld [smem:[#allocation2 + $0x46]]
    %v909 = vstv %s907
    %v910 = vmul.f32 %v102, %v909
    %v911 = vmul.f32 %v103, %v909
    %v912 = vmul.f32 %v104, %v909
    %v913 = vmul.f32 %v105, %v909
    %v914 = vstv %s908
    %v915 = vmul.f32 %v80, %v914
    %v916 = vmul.f32 %v87, %v914
    %v917 = vmul.f32 %v94, %v914
    %v918 = vmul.f32 %v101, %v914
    %v919 = vadd.f32 %v910, %v915
    %v920 = vadd.f32 %v911, %v916
    %v921 = vadd.f32 %v912, %v917
    %v922 = vadd.f32 %v913, %v918
    %v927 = vsel %vm155, %v921, %v919
    %v928 = vsel %vm155, %v922, %v920
    %931 = vrot.lane.b32.xlu0 %v927, 3
    %v932 = vpop.permute.xlu0 %931
    %933 = vrot.lane.b32.xlu0 %v928, 3
    %v934 = vpop.permute.xlu0 %933
    %vm935 = vcmp.lt.s32.totalorder %v107, 3
    %v936 = vsel %vm935, %v932, %v934
    %v937 = vsel %vm935, %v934, %v932
    %v938 = vsel %vm113, %v937, 0.0
    %v939 = vsel %vm114, %v936, 0.0
    %v940 = vadd.f32 %v905, %v938
    %v941 = vadd.f32 %v906, %v939
    %s942 = sld [smem:[#allocation2 + $0x16]]
    %s943 = sld [smem:[#allocation2 + $0x47]]
    %v944 = vstv %s942
    %v945 = vmul.f32 %v102, %v944
    %v946 = vmul.f32 %v103, %v944
    %v947 = vmul.f32 %v104, %v944
    %v948 = vmul.f32 %v105, %v944
    %v949 = vstv %s943
    %v950 = vmul.f32 %v80, %v949
    %v951 = vmul.f32 %v87, %v949
    %v952 = vmul.f32 %v94, %v949
    %v953 = vmul.f32 %v101, %v949
    %v954 = vadd.f32 %v945, %v950
    %v955 = vadd.f32 %v946, %v951
    %v956 = vadd.f32 %v947, %v952
    %v957 = vadd.f32 %v948, %v953
    %v962 = vsel %vm155, %v956, %v954
    %v963 = vsel %vm155, %v957, %v955
    %966 = vrot.lane.b32.xlu0 %v962, 2
    %v967 = vpop.permute.xlu0 %966
    %968 = vrot.lane.b32.xlu0 %v963, 2
    %v969 = vpop.permute.xlu0 %968
    %vm970 = vcmp.lt.s32.totalorder %v107, 2
    %v971 = vsel %vm970, %v967, %v969
    %v972 = vsel %vm970, %v969, %v967
    %v973 = vsel %vm117, %v972, 0.0
    %v974 = vsel %vm118, %v971, 0.0
    %v975 = vadd.f32 %v940, %v973
    %v976 = vadd.f32 %v941, %v974
    %s977 = sld [smem:[#allocation2 + $0x17]]
    %s978 = sld [smem:[#allocation2 + $0x48]]
    %v979 = vstv %s977
    %v980 = vmul.f32 %v102, %v979
    %v981 = vmul.f32 %v103, %v979
    %v982 = vmul.f32 %v104, %v979
    %v983 = vmul.f32 %v105, %v979
    %v984 = vstv %s978
    %v985 = vmul.f32 %v80, %v984
    %v986 = vmul.f32 %v87, %v984
    %v987 = vmul.f32 %v94, %v984
    %v988 = vmul.f32 %v101, %v984
    %v989 = vadd.f32 %v980, %v985
    %v990 = vadd.f32 %v981, %v986
    %v991 = vadd.f32 %v982, %v987
    %v992 = vadd.f32 %v983, %v988
    %v997 = vsel %vm155, %v991, %v989
    %v998 = vsel %vm155, %v992, %v990
    %1001 = vrot.lane.b32.xlu0 %v997, 1
    %v1002 = vpop.permute.xlu0 %1001
    %1003 = vrot.lane.b32.xlu0 %v998, 1
    %v1004 = vpop.permute.xlu0 %1003
    %vm1005 = vcmp.lt.s32.totalorder %v107, 1
    %v1006 = vsel %vm1005, %v1002, %v1004
    %v1007 = vsel %vm1005, %v1004, %v1002
    %v1008 = vsel %vm121, %v1007, 0.0
    %v1009 = vsel %vm122, %v1006, 0.0
    %v1010 = vadd.f32 %v975, %v1008
    %v1011 = vadd.f32 %v976, %v1009
    %s1012 = sld [smem:[#allocation2 + $0x18]]
    %s1013 = sld [smem:[#allocation2 + $0x49]]
    %v1014 = vstv %s1012
    %v1015 = vmul.f32 %v102, %v1014
    %v1016 = vmul.f32 %v103, %v1014
    %v1017 = vmul.f32 %v104, %v1014
    %v1018 = vmul.f32 %v105, %v1014
    %v1019 = vstv %s1013
    %v1020 = vmul.f32 %v80, %v1019
    %v1021 = vmul.f32 %v87, %v1019
    %v1022 = vmul.f32 %v94, %v1019
    %v1023 = vmul.f32 %v101, %v1019
    %v1024 = vadd.f32 %v1015, %v1020
    %v1025 = vadd.f32 %v1016, %v1021
    %v1026 = vadd.f32 %v1017, %v1022
    %v1027 = vadd.f32 %v1018, %v1023
    %v1032 = vsel %vm155, %v1026, %v1024
    %v1033 = vsel %vm155, %v1027, %v1025
    %v1036 = vadd.f32 %v1010, %v1032
    %v1037 = vadd.f32 %v1011, %v1033
    %s1038 = sld [smem:[#allocation2 + $0x19]]
    %s1039 = sld [smem:[#allocation2 + $0x4a]]
    %v1040 = vstv %s1038
    %v1041 = vmul.f32 %v102, %v1040
    %v1042 = vmul.f32 %v103, %v1040
    %v1043 = vmul.f32 %v104, %v1040
    %v1044 = vmul.f32 %v105, %v1040
    %v1045 = vstv %s1039
    %v1046 = vmul.f32 %v80, %v1045
    %v1047 = vmul.f32 %v87, %v1045
    %v1048 = vmul.f32 %v94, %v1045
    %v1049 = vmul.f32 %v101, %v1045
    %v1050 = vadd.f32 %v1041, %v1046
    %v1051 = vadd.f32 %v1042, %v1047
    %v1052 = vadd.f32 %v1043, %v1048
    %v1053 = vadd.f32 %v1044, %v1049
    %v1058 = vsel %vm155, %v1052, %v1050
    %v1059 = vsel %vm155, %v1053, %v1051
    %1062 = vrot.lane.b32.xlu0 %v1058, 127
    %v1063 = vpop.permute.xlu0 %1062
    %1064 = vrot.lane.b32.xlu0 %v1059, 127
    %v1065 = vpop.permute.xlu0 %1064
    %vm1066 = vcmp.lt.s32.totalorder %v107, 127
    %v1067 = vsel %vm1066, %v1063, %v1065
    %v1068 = vsel %vm1066, %v1065, %v1063
    %v1069 = vsel %vm125, %v1067, 0.0
    %v1070 = vsel %vm126, %v1068, 0.0
    %v1071 = vadd.f32 %v1036, %v1069
    %v1072 = vadd.f32 %v1037, %v1070
    %s1073 = sld [smem:[#allocation2 + $0x1a]]
    %s1074 = sld [smem:[#allocation2 + $0x4b]]
    %v1075 = vstv %s1073
    %v1076 = vmul.f32 %v102, %v1075
    %v1077 = vmul.f32 %v103, %v1075
    %v1078 = vmul.f32 %v104, %v1075
    %v1079 = vmul.f32 %v105, %v1075
    %v1080 = vstv %s1074
    %v1081 = vmul.f32 %v80, %v1080
    %v1082 = vmul.f32 %v87, %v1080
    %v1083 = vmul.f32 %v94, %v1080
    %v1084 = vmul.f32 %v101, %v1080
    %v1085 = vadd.f32 %v1076, %v1081
    %v1086 = vadd.f32 %v1077, %v1082
    %v1087 = vadd.f32 %v1078, %v1083
    %v1088 = vadd.f32 %v1079, %v1084
    %v1093 = vsel %vm155, %v1087, %v1085
    %v1094 = vsel %vm155, %v1088, %v1086
    %1097 = vrot.lane.b32.xlu0 %v1093, 126
    %v1098 = vpop.permute.xlu0 %1097
    %1099 = vrot.lane.b32.xlu0 %v1094, 126
    %v1100 = vpop.permute.xlu0 %1099
    %vm1101 = vcmp.lt.s32.totalorder %v107, 126
    %v1102 = vsel %vm1101, %v1098, %v1100
    %v1103 = vsel %vm1101, %v1100, %v1098
    %v1104 = vsel %vm129, %v1102, 0.0
    %v1105 = vsel %vm130, %v1103, 0.0
    %v1106 = vadd.f32 %v1071, %v1104
    %v1107 = vadd.f32 %v1072, %v1105
    %s1108 = sld [smem:[#allocation2 + $0x1b]]
    %s1109 = sld [smem:[#allocation2 + $0x4c]]
    %v1110 = vstv %s1108
    %v1111 = vmul.f32 %v102, %v1110
    %v1112 = vmul.f32 %v103, %v1110
    %v1113 = vmul.f32 %v104, %v1110
    %v1114 = vmul.f32 %v105, %v1110
    %v1115 = vstv %s1109
    %v1116 = vmul.f32 %v80, %v1115
    %v1117 = vmul.f32 %v87, %v1115
    %v1118 = vmul.f32 %v94, %v1115
    %v1119 = vmul.f32 %v101, %v1115
    %v1120 = vadd.f32 %v1111, %v1116
    %v1121 = vadd.f32 %v1112, %v1117
    %v1122 = vadd.f32 %v1113, %v1118
    %v1123 = vadd.f32 %v1114, %v1119
    %v1128 = vsel %vm155, %v1122, %v1120
    %v1129 = vsel %vm155, %v1123, %v1121
    %1132 = vrot.lane.b32.xlu0 %v1128, 125
    %v1133 = vpop.permute.xlu0 %1132
    %1134 = vrot.lane.b32.xlu0 %v1129, 125
    %v1135 = vpop.permute.xlu0 %1134
    %vm1136 = vcmp.lt.s32.totalorder %v107, 125
    %v1137 = vsel %vm1136, %v1133, %v1135
    %v1138 = vsel %vm1136, %v1135, %v1133
    %v1139 = vsel %vm133, %v1137, 0.0
    %v1140 = vsel %vm134, %v1138, 0.0
    %v1141 = vadd.f32 %v1106, %v1139
    %v1142 = vadd.f32 %v1107, %v1140
    %s1143 = sld [smem:[#allocation2 + $0x1c]]
    %s1144 = sld [smem:[#allocation2 + $0x4d]]
    %v1145 = vstv %s1143
    %v1146 = vmul.f32 %v102, %v1145
    %v1147 = vmul.f32 %v103, %v1145
    %v1148 = vmul.f32 %v104, %v1145
    %v1149 = vmul.f32 %v105, %v1145
    %v1150 = vstv %s1144
    %v1151 = vmul.f32 %v80, %v1150
    %v1152 = vmul.f32 %v87, %v1150
    %v1153 = vmul.f32 %v94, %v1150
    %v1154 = vmul.f32 %v101, %v1150
    %v1155 = vadd.f32 %v1146, %v1151
    %v1156 = vadd.f32 %v1147, %v1152
    %v1157 = vadd.f32 %v1148, %v1153
    %v1158 = vadd.f32 %v1149, %v1154
    %v1163 = vsel %vm155, %v1157, %v1155
    %v1164 = vsel %vm155, %v1158, %v1156
    %1167 = vrot.lane.b32.xlu0 %v1163, 115
    %v1168 = vpop.permute.xlu0 %1167
    %1169 = vrot.lane.b32.xlu0 %v1164, 115
    %v1170 = vpop.permute.xlu0 %1169
    %vm1171 = vcmp.lt.s32.totalorder %v107, 115
    %v1172 = vsel %vm1171, %v1168, %v1170
    %v1173 = vsel %vm1171, %v1170, %v1168
    %vm1174 = vmand %vm123, %vm113
    %vm1175 = vmand %vm124, %vm114
    %v1176 = vsel %vm1174, %v1172, 0.0
    %v1177 = vsel %vm1175, %v1173, 0.0
    %v1178 = vadd.f32 %v1141, %v1176
    %v1179 = vadd.f32 %v1142, %v1177
    %s1180 = sld [smem:[#allocation2 + $0x1d]]
    %s1181 = sld [smem:[#allocation2 + $0x4e]]
    %v1182 = vstv %s1180
    %v1183 = vmul.f32 %v102, %v1182
    %v1184 = vmul.f32 %v103, %v1182
    %v1185 = vmul.f32 %v104, %v1182
    %v1186 = vmul.f32 %v105, %v1182
    %v1187 = vstv %s1181
    %v1188 = vmul.f32 %v80, %v1187
    %v1189 = vmul.f32 %v87, %v1187
    %v1190 = vmul.f32 %v94, %v1187
    %v1191 = vmul.f32 %v101, %v1187
    %v1192 = vadd.f32 %v1183, %v1188
    %v1193 = vadd.f32 %v1184, %v1189
    %v1194 = vadd.f32 %v1185, %v1190
    %v1195 = vadd.f32 %v1186, %v1191
    %v1200 = vsel %vm155, %v1194, %v1192
    %v1201 = vsel %vm155, %v1195, %v1193
    %1204 = vrot.lane.b32.xlu0 %v1200, 114
    %v1205 = vpop.permute.xlu0 %1204
    %1206 = vrot.lane.b32.xlu0 %v1201, 114
    %v1207 = vpop.permute.xlu0 %1206
    %vm1208 = vcmp.lt.s32.totalorder %v107, 114
    %v1209 = vsel %vm1208, %v1205, %v1207
    %v1210 = vsel %vm1208, %v1207, %v1205
    %vm1211 = vmand %vm123, %vm117
    %vm1212 = vmand %vm124, %vm118
    %v1213 = vsel %vm1211, %v1209, 0.0
    %v1214 = vsel %vm1212, %v1210, 0.0
    %v1215 = vadd.f32 %v1178, %v1213
    %v1216 = vadd.f32 %v1179, %v1214
    %s1217 = sld [smem:[#allocation2 + $0x1e]]
    %s1218 = sld [smem:[#allocation2 + $0x4f]]
    %v1219 = vstv %s1217
    %v1220 = vmul.f32 %v102, %v1219
    %v1221 = vmul.f32 %v103, %v1219
    %v1222 = vmul.f32 %v104, %v1219
    %v1223 = vmul.f32 %v105, %v1219
    %v1224 = vstv %s1218
    %v1225 = vmul.f32 %v80, %v1224
    %v1226 = vmul.f32 %v87, %v1224
    %v1227 = vmul.f32 %v94, %v1224
    %v1228 = vmul.f32 %v101, %v1224
    %v1229 = vadd.f32 %v1220, %v1225
    %v1230 = vadd.f32 %v1221, %v1226
    %v1231 = vadd.f32 %v1222, %v1227
    %v1232 = vadd.f32 %v1223, %v1228
    %v1237 = vsel %vm155, %v1231, %v1229
    %v1238 = vsel %vm155, %v1232, %v1230
    %1241 = vrot.lane.b32.xlu0 %v1237, 113
    %v1242 = vpop.permute.xlu0 %1241
    %1243 = vrot.lane.b32.xlu0 %v1238, 113
    %v1244 = vpop.permute.xlu0 %1243
    %vm1245 = vcmp.lt.s32.totalorder %v107, 113
    %v1246 = vsel %vm1245, %v1242, %v1244
    %v1247 = vsel %vm1245, %v1244, %v1242
    %vm1248 = vmand %vm123, %vm121
    %vm1249 = vmand %vm124, %vm122
    %v1250 = vsel %vm1248, %v1246, 0.0
    %v1251 = vsel %vm1249, %v1247, 0.0
    %v1252 = vadd.f32 %v1215, %v1250
    %v1253 = vadd.f32 %v1216, %v1251
    %s1254 = sld [smem:[#allocation2 + $0x1f]]
    %s1255 = sld [smem:[#allocation2 + $0x50]]
    %v1256 = vstv %s1254
    %v1257 = vmul.f32 %v102, %v1256
    %v1258 = vmul.f32 %v103, %v1256
    %v1259 = vmul.f32 %v104, %v1256
    %v1260 = vmul.f32 %v105, %v1256
    %v1261 = vstv %s1255
    %v1262 = vmul.f32 %v80, %v1261
    %v1263 = vmul.f32 %v87, %v1261
    %v1264 = vmul.f32 %v94, %v1261
    %v1265 = vmul.f32 %v101, %v1261
    %v1266 = vadd.f32 %v1257, %v1262
    %v1267 = vadd.f32 %v1258, %v1263
    %v1268 = vadd.f32 %v1259, %v1264
    %v1269 = vadd.f32 %v1260, %v1265
    %v1274 = vsel %vm155, %v1268, %v1266
    %v1275 = vsel %vm155, %v1269, %v1267
    %1278 = vrot.lane.b32.xlu0 %v1274, 112
    %v1279 = vpop.permute.xlu0 %1278
    %1280 = vrot.lane.b32.xlu0 %v1275, 112
    %v1281 = vpop.permute.xlu0 %1280
    %vm1282 = vcmp.lt.s32.totalorder %v107, 112
    %v1283 = vsel %vm1282, %v1279, %v1281
    %v1284 = vsel %vm1282, %v1281, %v1279
    %v1285 = vsel %vm123, %v1283, 0.0
    %v1286 = vsel %vm124, %v1284, 0.0
    %v1287 = vadd.f32 %v1252, %v1285
    %v1288 = vadd.f32 %v1253, %v1286
    %s1289 = sld [smem:[#allocation2 + $0x20]]
    %s1290 = sld [smem:[#allocation2 + $0x51]]
    %v1291 = vstv %s1289
    %v1292 = vmul.f32 %v102, %v1291
    %v1293 = vmul.f32 %v103, %v1291
    %v1294 = vmul.f32 %v104, %v1291
    %v1295 = vmul.f32 %v105, %v1291
    %v1296 = vstv %s1290
    %v1297 = vmul.f32 %v80, %v1296
    %v1298 = vmul.f32 %v87, %v1296
    %v1299 = vmul.f32 %v94, %v1296
    %v1300 = vmul.f32 %v101, %v1296
    %v1301 = vadd.f32 %v1292, %v1297
    %v1302 = vadd.f32 %v1293, %v1298
    %v1303 = vadd.f32 %v1294, %v1299
    %v1304 = vadd.f32 %v1295, %v1300
    %v1309 = vsel %vm155, %v1303, %v1301
    %v1310 = vsel %vm155, %v1304, %v1302
    %1313 = vrot.lane.b32.xlu0 %v1309, 111
    %v1314 = vpop.permute.xlu0 %1313
    %1315 = vrot.lane.b32.xlu0 %v1310, 111
    %v1316 = vpop.permute.xlu0 %1315
    %vm1317 = vcmp.lt.s32.totalorder %v107, 111
    %v1318 = vsel %vm1317, %v1314, %v1316
    %v1319 = vsel %vm1317, %v1316, %v1314
    %vm1320 = vmand %vm123, %vm125
    %vm1321 = vmand %vm124, %vm126
    %v1322 = vsel %vm1320, %v1318, 0.0
    %v1323 = vsel %vm1321, %v1319, 0.0
    %v1324 = vadd.f32 %v1287, %v1322
    %v1325 = vadd.f32 %v1288, %v1323
    %s1326 = sld [smem:[#allocation2 + $0x21]]
    %s1327 = sld [smem:[#allocation2 + $0x52]]
    %v1328 = vstv %s1326
    %v1329 = vmul.f32 %v102, %v1328
    %v1330 = vmul.f32 %v103, %v1328
    %v1331 = vmul.f32 %v104, %v1328
    %v1332 = vmul.f32 %v105, %v1328
    %v1333 = vstv %s1327
    %v1334 = vmul.f32 %v80, %v1333
    %v1335 = vmul.f32 %v87, %v1333
    %v1336 = vmul.f32 %v94, %v1333
    %v1337 = vmul.f32 %v101, %v1333
    %v1338 = vadd.f32 %v1329, %v1334
    %v1339 = vadd.f32 %v1330, %v1335
    %v1340 = vadd.f32 %v1331, %v1336
    %v1341 = vadd.f32 %v1332, %v1337
    %v1346 = vsel %vm155, %v1340, %v1338
    %v1347 = vsel %vm155, %v1341, %v1339
    %1350 = vrot.lane.b32.xlu0 %v1346, 110
    %v1351 = vpop.permute.xlu0 %1350
    %1352 = vrot.lane.b32.xlu0 %v1347, 110
    %v1353 = vpop.permute.xlu0 %1352
    %vm1354 = vcmp.lt.s32.totalorder %v107, 110
    %v1355 = vsel %vm1354, %v1351, %v1353
    %v1356 = vsel %vm1354, %v1353, %v1351
    %vm1357 = vmand %vm123, %vm129
    %vm1358 = vmand %vm124, %vm130
    %v1359 = vsel %vm1357, %v1355, 0.0
    %v1360 = vsel %vm1358, %v1356, 0.0
    %v1361 = vadd.f32 %v1324, %v1359
    %v1362 = vadd.f32 %v1325, %v1360
    %s1363 = sld [smem:[#allocation2 + $0x22]]
    %s1364 = sld [smem:[#allocation2 + $0x53]]
    %v1365 = vstv %s1363
    %v1366 = vmul.f32 %v102, %v1365
    %v1367 = vmul.f32 %v103, %v1365
    %v1368 = vmul.f32 %v104, %v1365
    %v1369 = vmul.f32 %v105, %v1365
    %v1370 = vstv %s1364
    %v1371 = vmul.f32 %v80, %v1370
    %v1372 = vmul.f32 %v87, %v1370
    %v1373 = vmul.f32 %v94, %v1370
    %v1374 = vmul.f32 %v101, %v1370
    %v1375 = vadd.f32 %v1366, %v1371
    %v1376 = vadd.f32 %v1367, %v1372
    %v1377 = vadd.f32 %v1368, %v1373
    %v1378 = vadd.f32 %v1369, %v1374
    %v1383 = vsel %vm155, %v1377, %v1375
    %v1384 = vsel %vm155, %v1378, %v1376
    %1387 = vrot.lane.b32.xlu0 %v1383, 109
    %v1388 = vpop.permute.xlu0 %1387
    %1389 = vrot.lane.b32.xlu0 %v1384, 109
    %v1390 = vpop.permute.xlu0 %1389
    %vm1391 = vcmp.lt.s32.totalorder %v107, 109
    %v1392 = vsel %vm1391, %v1388, %v1390
    %v1393 = vsel %vm1391, %v1390, %v1388
    %vm1394 = vmand %vm123, %vm133
    %vm1395 = vmand %vm124, %vm134
    %v1396 = vsel %vm1394, %v1392, 0.0
    %v1397 = vsel %vm1395, %v1393, 0.0
    %v1398 = vadd.f32 %v1361, %v1396
    %v1399 = vadd.f32 %v1362, %v1397
    %s1400 = sld [smem:[#allocation2 + $0x23]]
    %s1401 = sld [smem:[#allocation2 + $0x54]]
    %v1402 = vstv %s1400
    %v1403 = vmul.f32 %v102, %v1402
    %v1404 = vmul.f32 %v103, %v1402
    %v1405 = vmul.f32 %v104, %v1402
    %v1406 = vmul.f32 %v105, %v1402
    %v1407 = vstv %s1401
    %v1408 = vmul.f32 %v80, %v1407
    %v1409 = vmul.f32 %v87, %v1407
    %v1410 = vmul.f32 %v94, %v1407
    %v1411 = vmul.f32 %v101, %v1407
    %v1412 = vadd.f32 %v1403, %v1408
    %v1413 = vadd.f32 %v1404, %v1409
    %v1414 = vadd.f32 %v1405, %v1410
    %v1415 = vadd.f32 %v1406, %v1411
    %v1420 = vsel %vm155, %v1414, %v1412
    %v1421 = vsel %vm155, %v1415, %v1413
    %1424 = vrot.lane.b32.xlu0 %v1420, 99
    %v1425 = vpop.permute.xlu0 %1424
    %1426 = vrot.lane.b32.xlu0 %v1421, 99
    %v1427 = vpop.permute.xlu0 %1426
    %vm1428 = vcmp.lt.s32.totalorder %v107, 99
    %v1429 = vsel %vm1428, %v1425, %v1427
    %v1430 = vsel %vm1428, %v1427, %v1425
    %vm1431 = vmand %vm127, %vm113
    %vm1432 = vmand %vm128, %vm114
    %v1433 = vsel %vm1431, %v1429, 0.0
    %v1434 = vsel %vm1432, %v1430, 0.0
    %v1435 = vadd.f32 %v1398, %v1433
    %v1436 = vadd.f32 %v1399, %v1434
    %s1437 = sld [smem:[#allocation2 + $0x24]]
    %s1438 = sld [smem:[#allocation2 + $0x55]]
    %v1439 = vstv %s1437
    %v1440 = vmul.f32 %v102, %v1439
    %v1441 = vmul.f32 %v103, %v1439
    %v1442 = vmul.f32 %v104, %v1439
    %v1443 = vmul.f32 %v105, %v1439
    %v1444 = vstv %s1438
    %v1445 = vmul.f32 %v80, %v1444
    %v1446 = vmul.f32 %v87, %v1444
    %v1447 = vmul.f32 %v94, %v1444
    %v1448 = vmul.f32 %v101, %v1444
    %v1449 = vadd.f32 %v1440, %v1445
    %v1450 = vadd.f32 %v1441, %v1446
    %v1451 = vadd.f32 %v1442, %v1447
    %v1452 = vadd.f32 %v1443, %v1448
    %v1457 = vsel %vm155, %v1451, %v1449
    %v1458 = vsel %vm155, %v1452, %v1450
    %1461 = vrot.lane.b32.xlu0 %v1457, 98
    %v1462 = vpop.permute.xlu0 %1461
    %1463 = vrot.lane.b32.xlu0 %v1458, 98
    %v1464 = vpop.permute.xlu0 %1463
    %vm1465 = vcmp.lt.s32.totalorder %v107, 98
    %v1466 = vsel %vm1465, %v1462, %v1464
    %v1467 = vsel %vm1465, %v1464, %v1462
    %vm1468 = vmand %vm127, %vm117
    %vm1469 = vmand %vm128, %vm118
    %v1470 = vsel %vm1468, %v1466, 0.0
    %v1471 = vsel %vm1469, %v1467, 0.0
    %v1472 = vadd.f32 %v1435, %v1470
    %v1473 = vadd.f32 %v1436, %v1471
    %s1474 = sld [smem:[#allocation2 + $0x25]]
    %s1475 = sld [smem:[#allocation2 + $0x56]]
    %v1476 = vstv %s1474
    %v1477 = vmul.f32 %v102, %v1476
    %v1478 = vmul.f32 %v103, %v1476
    %v1479 = vmul.f32 %v104, %v1476
    %v1480 = vmul.f32 %v105, %v1476
    %v1481 = vstv %s1475
    %v1482 = vmul.f32 %v80, %v1481
    %v1483 = vmul.f32 %v87, %v1481
    %v1484 = vmul.f32 %v94, %v1481
    %v1485 = vmul.f32 %v101, %v1481
    %v1486 = vadd.f32 %v1477, %v1482
    %v1487 = vadd.f32 %v1478, %v1483
    %v1488 = vadd.f32 %v1479, %v1484
    %v1489 = vadd.f32 %v1480, %v1485
    %v1494 = vsel %vm155, %v1488, %v1486
    %v1495 = vsel %vm155, %v1489, %v1487
    %1498 = vrot.lane.b32.xlu0 %v1494, 97
    %v1499 = vpop.permute.xlu0 %1498
    %1500 = vrot.lane.b32.xlu0 %v1495, 97
    %v1501 = vpop.permute.xlu0 %1500
    %vm1502 = vcmp.lt.s32.totalorder %v107, 97
    %v1503 = vsel %vm1502, %v1499, %v1501
    %v1504 = vsel %vm1502, %v1501, %v1499
    %vm1505 = vmand %vm127, %vm121
    %vm1506 = vmand %vm128, %vm122
    %v1507 = vsel %vm1505, %v1503, 0.0
    %v1508 = vsel %vm1506, %v1504, 0.0
    %v1509 = vadd.f32 %v1472, %v1507
    %v1510 = vadd.f32 %v1473, %v1508
    %s1511 = sld [smem:[#allocation2 + $0x26]]
    %s1512 = sld [smem:[#allocation2 + $0x57]]
    %v1513 = vstv %s1511
    %v1514 = vmul.f32 %v102, %v1513
    %v1515 = vmul.f32 %v103, %v1513
    %v1516 = vmul.f32 %v104, %v1513
    %v1517 = vmul.f32 %v105, %v1513
    %v1518 = vstv %s1512
    %v1519 = vmul.f32 %v80, %v1518
    %v1520 = vmul.f32 %v87, %v1518
    %v1521 = vmul.f32 %v94, %v1518
    %v1522 = vmul.f32 %v101, %v1518
    %v1523 = vadd.f32 %v1514, %v1519
    %v1524 = vadd.f32 %v1515, %v1520
    %v1525 = vadd.f32 %v1516, %v1521
    %v1526 = vadd.f32 %v1517, %v1522
    %v1531 = vsel %vm155, %v1525, %v1523
    %v1532 = vsel %vm155, %v1526, %v1524
    %1535 = vrot.lane.b32.xlu0 %v1531, 96
    %v1536 = vpop.permute.xlu0 %1535
    %1537 = vrot.lane.b32.xlu0 %v1532, 96
    %v1538 = vpop.permute.xlu0 %1537
    %vm1539 = vcmp.lt.s32.totalorder %v107, 96
    %v1540 = vsel %vm1539, %v1536, %v1538
    %v1541 = vsel %vm1539, %v1538, %v1536
    %v1542 = vsel %vm127, %v1540, 0.0
    %v1543 = vsel %vm128, %v1541, 0.0
    %v1544 = vadd.f32 %v1509, %v1542
    %v1545 = vadd.f32 %v1510, %v1543
    %s1546 = sld [smem:[#allocation2 + $0x27]]
    %s1547 = sld [smem:[#allocation2 + $0x58]]
    %v1548 = vstv %s1546
    %v1549 = vmul.f32 %v102, %v1548
    %v1550 = vmul.f32 %v103, %v1548
    %v1551 = vmul.f32 %v104, %v1548
    %v1552 = vmul.f32 %v105, %v1548
    %v1553 = vstv %s1547
    %v1554 = vmul.f32 %v80, %v1553
    %v1555 = vmul.f32 %v87, %v1553
    %v1556 = vmul.f32 %v94, %v1553
    %v1557 = vmul.f32 %v101, %v1553
    %v1558 = vadd.f32 %v1549, %v1554
    %v1559 = vadd.f32 %v1550, %v1555
    %v1560 = vadd.f32 %v1551, %v1556
    %v1561 = vadd.f32 %v1552, %v1557
    %v1566 = vsel %vm155, %v1560, %v1558
    %v1567 = vsel %vm155, %v1561, %v1559
    %1570 = vrot.lane.b32.xlu0 %v1566, 95
    %v1571 = vpop.permute.xlu0 %1570
    %1572 = vrot.lane.b32.xlu0 %v1567, 95
    %v1573 = vpop.permute.xlu0 %1572
    %vm1574 = vcmp.lt.s32.totalorder %v107, 95
    %v1575 = vsel %vm1574, %v1571, %v1573
    %v1576 = vsel %vm1574, %v1573, %v1571
    %vm1577 = vmand %vm127, %vm125
    %vm1578 = vmand %vm128, %vm126
    %v1579 = vsel %vm1577, %v1575, 0.0
    %v1580 = vsel %vm1578, %v1576, 0.0
    %v1581 = vadd.f32 %v1544, %v1579
    %v1582 = vadd.f32 %v1545, %v1580
    %s1583 = sld [smem:[#allocation2 + $0x28]]
    %s1584 = sld [smem:[#allocation2 + $0x59]]
    %v1585 = vstv %s1583
    %v1586 = vmul.f32 %v102, %v1585
    %v1587 = vmul.f32 %v103, %v1585
    %v1588 = vmul.f32 %v104, %v1585
    %v1589 = vmul.f32 %v105, %v1585
    %v1590 = vstv %s1584
    %v1591 = vmul.f32 %v80, %v1590
    %v1592 = vmul.f32 %v87, %v1590
    %v1593 = vmul.f32 %v94, %v1590
    %v1594 = vmul.f32 %v101, %v1590
    %v1595 = vadd.f32 %v1586, %v1591
    %v1596 = vadd.f32 %v1587, %v1592
    %v1597 = vadd.f32 %v1588, %v1593
    %v1598 = vadd.f32 %v1589, %v1594
    %v1603 = vsel %vm155, %v1597, %v1595
    %v1604 = vsel %vm155, %v1598, %v1596
    %1607 = vrot.lane.b32.xlu0 %v1603, 94
    %v1608 = vpop.permute.xlu0 %1607
    %1609 = vrot.lane.b32.xlu0 %v1604, 94
    %v1610 = vpop.permute.xlu0 %1609
    %vm1611 = vcmp.lt.s32.totalorder %v107, 94
    %v1612 = vsel %vm1611, %v1608, %v1610
    %v1613 = vsel %vm1611, %v1610, %v1608
    %vm1614 = vmand %vm127, %vm129
    %vm1615 = vmand %vm128, %vm130
    %v1616 = vsel %vm1614, %v1612, 0.0
    %v1617 = vsel %vm1615, %v1613, 0.0
    %v1618 = vadd.f32 %v1581, %v1616
    %v1619 = vadd.f32 %v1582, %v1617
    %s1620 = sld [smem:[#allocation2 + $0x29]]
    %s1621 = sld [smem:[#allocation2 + $0x5a]]
    %v1622 = vstv %s1620
    %v1623 = vmul.f32 %v102, %v1622
    %v1624 = vmul.f32 %v103, %v1622
    %v1625 = vmul.f32 %v104, %v1622
    %v1626 = vmul.f32 %v105, %v1622
    %v1627 = vstv %s1621
    %v1628 = vmul.f32 %v80, %v1627
    %v1629 = vmul.f32 %v87, %v1627
    %v1630 = vmul.f32 %v94, %v1627
    %v1631 = vmul.f32 %v101, %v1627
    %v1632 = vadd.f32 %v1623, %v1628
    %v1633 = vadd.f32 %v1624, %v1629
    %v1634 = vadd.f32 %v1625, %v1630
    %v1635 = vadd.f32 %v1626, %v1631
    %v1640 = vsel %vm155, %v1634, %v1632
    %v1641 = vsel %vm155, %v1635, %v1633
    %1644 = vrot.lane.b32.xlu0 %v1640, 93
    %v1645 = vpop.permute.xlu0 %1644
    %1646 = vrot.lane.b32.xlu0 %v1641, 93
    %v1647 = vpop.permute.xlu0 %1646
    %vm1648 = vcmp.lt.s32.totalorder %v107, 93
    %v1649 = vsel %vm1648, %v1645, %v1647
    %v1650 = vsel %vm1648, %v1647, %v1645
    %vm1651 = vmand %vm127, %vm133
    %vm1652 = vmand %vm128, %vm134
    %v1653 = vsel %vm1651, %v1649, 0.0
    %v1654 = vsel %vm1652, %v1650, 0.0
    %v1655 = vadd.f32 %v1618, %v1653
    %v1656 = vadd.f32 %v1619, %v1654
    %s1657 = sld [smem:[#allocation2 + $0x2a]]
    %s1658 = sld [smem:[#allocation2 + $0x5b]]
    %v1659 = vstv %s1657
    %v1660 = vmul.f32 %v102, %v1659
    %v1661 = vmul.f32 %v103, %v1659
    %v1662 = vmul.f32 %v104, %v1659
    %v1663 = vmul.f32 %v105, %v1659
    %v1664 = vstv %s1658
    %v1665 = vmul.f32 %v80, %v1664
    %v1666 = vmul.f32 %v87, %v1664
    %v1667 = vmul.f32 %v94, %v1664
    %v1668 = vmul.f32 %v101, %v1664
    %v1669 = vadd.f32 %v1660, %v1665
    %v1670 = vadd.f32 %v1661, %v1666
    %v1671 = vadd.f32 %v1662, %v1667
    %v1672 = vadd.f32 %v1663, %v1668
    %v1677 = vsel %vm155, %v1671, %v1669
    %v1678 = vsel %vm155, %v1672, %v1670
    %1681 = vrot.lane.b32.xlu0 %v1677, 83
    %v1682 = vpop.permute.xlu0 %1681
    %1683 = vrot.lane.b32.xlu0 %v1678, 83
    %v1684 = vpop.permute.xlu0 %1683
    %vm1685 = vcmp.lt.s32.totalorder %v107, 83
    %v1686 = vsel %vm1685, %v1682, %v1684
    %v1687 = vsel %vm1685, %v1684, %v1682
    %vm1688 = vmand %vm131, %vm113
    %vm1689 = vmand %vm132, %vm114
    %v1690 = vsel %vm1688, %v1686, 0.0
    %v1691 = vsel %vm1689, %v1687, 0.0
    %v1692 = vadd.f32 %v1655, %v1690
    %v1693 = vadd.f32 %v1656, %v1691
    %s1694 = sld [smem:[#allocation2 + $0x2b]]
    %s1695 = sld [smem:[#allocation2 + $0x5c]]
    %v1696 = vstv %s1694
    %v1697 = vmul.f32 %v102, %v1696
    %v1698 = vmul.f32 %v103, %v1696
    %v1699 = vmul.f32 %v104, %v1696
    %v1700 = vmul.f32 %v105, %v1696
    %v1701 = vstv %s1695
    %v1702 = vmul.f32 %v80, %v1701
    %v1703 = vmul.f32 %v87, %v1701
    %v1704 = vmul.f32 %v94, %v1701
    %v1705 = vmul.f32 %v101, %v1701
    %v1706 = vadd.f32 %v1697, %v1702
    %v1707 = vadd.f32 %v1698, %v1703
    %v1708 = vadd.f32 %v1699, %v1704
    %v1709 = vadd.f32 %v1700, %v1705
    %v1714 = vsel %vm155, %v1708, %v1706
    %v1715 = vsel %vm155, %v1709, %v1707
    %1718 = vrot.lane.b32.xlu0 %v1714, 82
    %v1719 = vpop.permute.xlu0 %1718
    %1720 = vrot.lane.b32.xlu0 %v1715, 82
    %v1721 = vpop.permute.xlu0 %1720
    %vm1722 = vcmp.lt.s32.totalorder %v107, 82
    %v1723 = vsel %vm1722, %v1719, %v1721
    %v1724 = vsel %vm1722, %v1721, %v1719
    %vm1725 = vmand %vm131, %vm117
    %vm1726 = vmand %vm132, %vm118
    %v1727 = vsel %vm1725, %v1723, 0.0
    %v1728 = vsel %vm1726, %v1724, 0.0
    %v1729 = vadd.f32 %v1692, %v1727
    %v1730 = vadd.f32 %v1693, %v1728
    %s1731 = sld [smem:[#allocation2 + $0x2c]]
    %s1732 = sld [smem:[#allocation2 + $0x5d]]
    %v1733 = vstv %s1731
    %v1734 = vmul.f32 %v102, %v1733
    %v1735 = vmul.f32 %v103, %v1733
    %v1736 = vmul.f32 %v104, %v1733
    %v1737 = vmul.f32 %v105, %v1733
    %v1738 = vstv %s1732
    %v1739 = vmul.f32 %v80, %v1738
    %v1740 = vmul.f32 %v87, %v1738
    %v1741 = vmul.f32 %v94, %v1738
    %v1742 = vmul.f32 %v101, %v1738
    %v1743 = vadd.f32 %v1734, %v1739
    %v1744 = vadd.f32 %v1735, %v1740
    %v1745 = vadd.f32 %v1736, %v1741
    %v1746 = vadd.f32 %v1737, %v1742
    %v1751 = vsel %vm155, %v1745, %v1743
    %v1752 = vsel %vm155, %v1746, %v1744
    %1755 = vrot.lane.b32.xlu0 %v1751, 81
    %v1756 = vpop.permute.xlu0 %1755
    %1757 = vrot.lane.b32.xlu0 %v1752, 81
    %v1758 = vpop.permute.xlu0 %1757
    %vm1759 = vcmp.lt.s32.totalorder %v107, 81
    %v1760 = vsel %vm1759, %v1756, %v1758
    %v1761 = vsel %vm1759, %v1758, %v1756
    %vm1762 = vmand %vm131, %vm121
    %vm1763 = vmand %vm132, %vm122
    %v1764 = vsel %vm1762, %v1760, 0.0
    %v1765 = vsel %vm1763, %v1761, 0.0
    %v1766 = vadd.f32 %v1729, %v1764
    %v1767 = vadd.f32 %v1730, %v1765
    %s1768 = sld [smem:[#allocation2 + $0x2d]]
    %s1769 = sld [smem:[#allocation2 + $0x5e]]
    %v1770 = vstv %s1768
    %v1771 = vmul.f32 %v102, %v1770
    %v1772 = vmul.f32 %v103, %v1770
    %v1773 = vmul.f32 %v104, %v1770
    %v1774 = vmul.f32 %v105, %v1770
    %v1775 = vstv %s1769
    %v1776 = vmul.f32 %v80, %v1775
    %v1777 = vmul.f32 %v87, %v1775
    %v1778 = vmul.f32 %v94, %v1775
    %v1779 = vmul.f32 %v101, %v1775
    %v1780 = vadd.f32 %v1771, %v1776
    %v1781 = vadd.f32 %v1772, %v1777
    %v1782 = vadd.f32 %v1773, %v1778
    %v1783 = vadd.f32 %v1774, %v1779
    %v1788 = vsel %vm155, %v1782, %v1780
    %v1789 = vsel %vm155, %v1783, %v1781
    %1792 = vrot.lane.b32.xlu0 %v1788, 80
    %v1793 = vpop.permute.xlu0 %1792
    %1794 = vrot.lane.b32.xlu0 %v1789, 80
    %v1795 = vpop.permute.xlu0 %1794
    %vm1796 = vcmp.lt.s32.totalorder %v107, 80
    %v1797 = vsel %vm1796, %v1793, %v1795
    %v1798 = vsel %vm1796, %v1795, %v1793
    %v1799 = vsel %vm131, %v1797, 0.0
    %v1800 = vsel %vm132, %v1798, 0.0
    %v1801 = vadd.f32 %v1766, %v1799
    %v1802 = vadd.f32 %v1767, %v1800
    %s1803 = sld [smem:[#allocation2 + $0x2e]]
    %s1804 = sld [smem:[#allocation2 + $0x5f]]
    %v1805 = vstv %s1803
    %v1806 = vmul.f32 %v102, %v1805
    %v1807 = vmul.f32 %v103, %v1805
    %v1808 = vmul.f32 %v104, %v1805
    %v1809 = vmul.f32 %v105, %v1805
    %v1810 = vstv %s1804
    %v1811 = vmul.f32 %v80, %v1810
    %v1812 = vmul.f32 %v87, %v1810
    %v1813 = vmul.f32 %v94, %v1810
    %v1814 = vmul.f32 %v101, %v1810
    %v1815 = vadd.f32 %v1806, %v1811
    %v1816 = vadd.f32 %v1807, %v1812
    %v1817 = vadd.f32 %v1808, %v1813
    %v1818 = vadd.f32 %v1809, %v1814
    %v1823 = vsel %vm155, %v1817, %v1815
    %v1824 = vsel %vm155, %v1818, %v1816
    %1827 = vrot.lane.b32.xlu0 %v1823, 79
    %v1828 = vpop.permute.xlu0 %1827
    %1829 = vrot.lane.b32.xlu0 %v1824, 79
    %v1830 = vpop.permute.xlu0 %1829
    %vm1831 = vcmp.lt.s32.totalorder %v107, 79
    %v1832 = vsel %vm1831, %v1828, %v1830
    %v1833 = vsel %vm1831, %v1830, %v1828
    %vm1834 = vmand %vm131, %vm125
    %vm1835 = vmand %vm132, %vm126
    %v1836 = vsel %vm1834, %v1832, 0.0
    %v1837 = vsel %vm1835, %v1833, 0.0
    %v1838 = vadd.f32 %v1801, %v1836
    %v1839 = vadd.f32 %v1802, %v1837
    %s1840 = sld [smem:[#allocation2 + $0x2f]]
    %s1841 = sld [smem:[#allocation2 + $0x60]]
    %v1842 = vstv %s1840
    %v1843 = vmul.f32 %v102, %v1842
    %v1844 = vmul.f32 %v103, %v1842
    %v1845 = vmul.f32 %v104, %v1842
    %v1846 = vmul.f32 %v105, %v1842
    %v1847 = vstv %s1841
    %v1848 = vmul.f32 %v80, %v1847
    %v1849 = vmul.f32 %v87, %v1847
    %v1850 = vmul.f32 %v94, %v1847
    %v1851 = vmul.f32 %v101, %v1847
    %v1852 = vadd.f32 %v1843, %v1848
    %v1853 = vadd.f32 %v1844, %v1849
    %v1854 = vadd.f32 %v1845, %v1850
    %v1855 = vadd.f32 %v1846, %v1851
    %v1860 = vsel %vm155, %v1854, %v1852
    %v1861 = vsel %vm155, %v1855, %v1853
    %1864 = vrot.lane.b32.xlu0 %v1860, 78
    %v1865 = vpop.permute.xlu0 %1864
    %1866 = vrot.lane.b32.xlu0 %v1861, 78
    %v1867 = vpop.permute.xlu0 %1866
    %vm1868 = vcmp.lt.s32.totalorder %v107, 78
    %v1869 = vsel %vm1868, %v1865, %v1867
    %v1870 = vsel %vm1868, %v1867, %v1865
    %vm1871 = vmand %vm131, %vm129
    %vm1872 = vmand %vm132, %vm130
    %v1873 = vsel %vm1871, %v1869, 0.0
    %v1874 = vsel %vm1872, %v1870, 0.0
    %v1875 = vadd.f32 %v1838, %v1873
    %v1876 = vadd.f32 %v1839, %v1874
    %s1877 = sld [smem:[#allocation2 + $0x30]]
    %s1878 = sld [smem:[#allocation2 + $0x61]]
    %v1879 = vstv %s1877
    %v1880 = vmul.f32 %v102, %v1879
    %v1881 = vmul.f32 %v103, %v1879
    %v1882 = vmul.f32 %v104, %v1879
    %v1883 = vmul.f32 %v105, %v1879
    %v1884 = vstv %s1878
    %v1885 = vmul.f32 %v80, %v1884
    %v1886 = vmul.f32 %v87, %v1884
    %v1887 = vmul.f32 %v94, %v1884
    %v1888 = vmul.f32 %v101, %v1884
    %v1889 = vadd.f32 %v1880, %v1885
    %v1890 = vadd.f32 %v1881, %v1886
    %v1891 = vadd.f32 %v1882, %v1887
    %v1892 = vadd.f32 %v1883, %v1888
    %v1897 = vsel %vm155, %v1891, %v1889
    %v1898 = vsel %vm155, %v1892, %v1890
    %1901 = vrot.lane.b32.xlu0 %v1897, 77
    %v1902 = vpop.permute.xlu0 %1901
    %1903 = vrot.lane.b32.xlu0 %v1898, 77
    %v1904 = vpop.permute.xlu0 %1903
    %vm1905 = vcmp.lt.s32.totalorder %v107, 77
    %v1906 = vsel %vm1905, %v1902, %v1904
    %v1907 = vsel %vm1905, %v1904, %v1902
    %vm1908 = vmand %vm131, %vm133
    %vm1909 = vmand %vm132, %vm134
    %v1910 = vsel %vm1908, %v1906, 0.0
    %v1911 = vsel %vm1909, %v1907, 0.0
    %v1912 = vadd.f32 %v1875, %v1910
    %v1913 = vadd.f32 %v1876, %v1911
    %v1914 = vxor.u32 %v1912, 2147483648
    %v1915 = vxor.u32 %v1913, 2147483648
    %v1916 = vmul.f32 %v1914, 1.442695
    %v1917 = vpow.pop %v1916
    %v1918 = vmul.f32 %v1915, 1.442695
    %v1919 = vpow.pop %v1918
    %v1920 = vadd.f32 %v1917, 1.0
    %v1921 = vadd.f32 %v1919, 1.0
    %v1922 = vrcp.pop %v1920
    %v1923 = vmul.f32 1.0, %v1922
    %v1924 = vrcp.pop %v1921
    %v1925 = vmul.f32 1.0, %v1924
    %v1928 = vcombine.low %v1923, %v1925
    %v1930 = vunpack.c.l.s4 1966171168
    %v1931 = vunpack.c.0.s8 %v1930
    %v1932 = vlaneseq
    %v1933 = vshrl.u32 %v1932, 7
    %v1934 = vsub.s32 %v1931, %v1933
    %v1935 = vrot.slane %v1928, %v1934
    %v1936 = vcombine.high %v1935, %v1935
    %v1938 = vunpack.c.l.s4 1966171168
    %v1939 = vunpack.c.0.s8 %v1938
    %v1940 = vlaneseq
    %v1941 = vshrl.u32 %v1940, 7
    %v1942 = vsub.s32 %v1939, %v1941
    %v1943 = vrot.slane %v1935, %v1942
    %v1945 = vunpack.c.l.s4 1966171168
    %v1946 = vunpack.c.0.s8 %v1945
    %v1947 = vlaneseq
    %v1948 = vshrl.u32 %v1947, 7
    %v1949 = vsub.s32 %v1946, %v1948
    %v1950 = vrot.slane %v1936, %v1949
    %v1951 = vlaneseq
    %v1952 = vshrl.u32 %v1951, 7
    %v1953 = vsub.s32 0, %v1952
    %v1954 = vrot.slane %v1943, %v1953
    %v1955 = vlaneseq
    %v1956 = vshrl.u32 %v1955, 7
    %v1957 = vsub.s32 1, %v1956
    %v1958 = vrot.slane %v1943, %v1957
    %v1959 = vlaneseq
    %v1960 = vshrl.u32 %v1959, 7
    %v1961 = vsub.s32 0, %v1960
    %v1962 = vrot.slane %v1950, %v1961
    %v1963 = vlaneseq
    %v1964 = vshrl.u32 %v1963, 7
    %v1965 = vsub.s32 1, %v1964
    %v1966 = vrot.slane %v1950, %v1965
    %v1967 = vcombine.low %v1954, %v1958
    %v1968 = vcombine.low %v1962, %v1966
    %v1971 = vmul.f32 %v37, %v1967
    %v1972 = vmul.f32 %v38, %v1968
    %1973 = vst [vmem:[#allocation7] sm:$0xff] %v1971
    %1974 = vst [vmem:[#allocation7 + $0x8] sm:$0xff] %v1972
    // Predicated region
    $region18: #{tpu_custom_call.1} parent=1 // pred_check
      _
    $region19: #{tpu_custom_call.1} parent=1 // pred_check_branch
      %1976 = sbr.rel (0) target = $region21
    $region20: #{tpu_custom_call.1} parent=1 // pred_region
      %s1978 = ssub.s32 256, 256
      %1979 = vsyncadd [#allocation4], %s1978
      %s1980 = sshll.u32 [#allocation7], 4
      %s1981 = int_to_ptr.vmem [resolvable:$true] %s1980
      %1986 = dma.vmem_to_hbm [thread:$0]  %s1981, 256, %s2, [#allocation4], 128, 128, 8
    $region21: #{tpu_custom_call.1} parent=1 // pred_fallthru
      _
    // Predicated region
    $region22: #{tpu_custom_call.1} parent=1 // pred_check
      _
    $region23: #{tpu_custom_call.1} parent=1 // pred_check_branch
      %1988 = sbr.rel (0) target = $region25
    $region24: #{tpu_custom_call.1} parent=1 // pred_region
      %1989 = dma.done [#allocation4], 256
    $region25: #{tpu_custom_call.1} parent=1 // pred_fallthru
      _
    %1990 = vsyncpa [#allocation3], 1
    %1991 = vsyncpa [#allocation4], 1
    %1992 = vsyncpa [#allocation5], 1

</llo_original>
